<compile_context>
chip_gen: v7x
topology: tpu7x:2x2x1
jax: 0.10.0
libtpu: 0.0.40
codegen_flags: <defaults>
</compile_context>

<pallas_src>
import functools

import jax
import jax.numpy as jnp
from jax import lax
from jax.experimental import pallas as pl
from jax.experimental.pallas import tpu as pltpu


def _attention_kernel(x_ref, wqkv_ref, wo_ref, bo_ref, o_ref, *, heads, head_dim):
    # One grid step == one batch element; all heads handled in-kernel.
    cdt = x_ref.dtype                 # MXU input dtype (f32 or bf16)
    N = x_ref.shape[1]
    D = heads * head_dim

    x = x_ref[0]                      # (N, D)

    # Fused Q/K/V projection: one wide MXU matmul, f32 accumulation.
    # `sel` and the softmax scale were folded into the weights in the wrapper.
    qkv = jnp.dot(x, wqkv_ref[...], preferred_element_type=jnp.float32)    # (N, 3D)
    qkv = qkv.astype(cdt)

    acc = jnp.zeros((N, D), dtype=jnp.float32)
    for h in range(heads):            # static unroll; head count is small (8-12)
        lo = h * head_dim
        q_h = qkv[:, lo:lo + head_dim]                                     # (N, d)
        k_h = qkv[:, D + lo:D + lo + head_dim]                             # (N, d)
        v_h = qkv[:, 2 * D + lo:2 * D + lo + head_dim]                     # (N, d)

        # Scores q_h @ k_h^T via explicit transposed-RHS contraction (MXU path).
        s = lax.dot_general(q_h, k_h, (((1,), (1,)), ((), ())),
                            preferred_element_type=jnp.float32)            # (N, N)
        # Softmax in f32.
        s = s - jnp.max(s, axis=-1, keepdims=True)
        p = jnp.exp(s)
        p = p * pl.reciprocal(jnp.sum(p, axis=-1, keepdims=True), approx=True)

        o_h = jnp.dot(p.astype(cdt), v_h, preferred_element_type=jnp.float32)  # (N, d)

        # Merge-heads + output projection without any concat:
        #   concat_h(o_h) @ Wo == sum_h o_h @ Wo[h*d:(h+1)*d, :]
        acc = acc + jnp.dot(o_h.astype(cdt), wo_ref[h],
                            preferred_element_type=jnp.float32)            # (N, D)

    # TODO(synk): nn.Dropout(dropout) is identity in eval mode; no kernel-side dropout.
    o_ref[0] = (acc + bo_ref[...]).astype(o_ref.dtype)


def attention_forward(x, wq, wk, wv, sel, wo, bo, *, heads,
                      compute_dtype=None, out_dtype=None, vmem_limit_bytes=None):
    B, N, D = x.shape
    assert D % heads == 0, "dim must be divisible by heads"
    d = D // heads
    scale = float(D) ** -0.5          # module uses dim**-0.5 (not head_dim**-0.5)

    # Fold channel_selection (column scale) + softmax scale into the weights,
    # then fuse Q/K/V into a single (D, 3D) slab (one DMA stream, one wide matmul).
    wq_f = wq * (sel * scale)[None, :]
    wk_f = wk * sel[None, :]
    wv_f = wv * sel[None, :]
    wqkv = jnp.concatenate([wq_f, wk_f, wv_f], axis=1)      # (D, 3D)

    # Output-projection weight pre-split into per-head slabs (H, d, D) so the
    # kernel indexes the leading axis only (no lane slicing of Wo).
    wo_h = wo.reshape(heads, d, D)
    bo2 = bo.reshape(1, D).astype(jnp.float32)

    # Optional reduced-precision MXU inputs (valid on v5e/v6e/v7x: accumulation
    # and softmax stay f32 in-kernel).
    x_c = x if compute_dtype is None else x.astype(compute_dtype)
    cdt = x_c.dtype
    wqkv = wqkv.astype(cdt)
    wo_h = wo_h.astype(cdt)

    if out_dtype is None:
        out_dtype = x.dtype

    if vmem_limit_bytes is None:
        # Generation-aware cap (~75% of physical VMEM: v5e/v6e ~96 MiB, v7x ~48 MiB).
        try:
            cap = int(pltpu.get_tpu_info().vmem_capacity_bytes)
        except Exception:
            cap = 64 * 1024 * 1024    # conservative (v7x) fallback
        itemsize = jnp.dtype(cdt).itemsize
        out_itemsize = jnp.dtype(out_dtype).itemsize
        need = (2 * 4 * D * D * itemsize                  # resident Wqkv + Wo (x2 buffers)
                + 2 * N * D * (itemsize + out_itemsize)   # x block + out block, double-buffered
                + (3 * N * D + 2 * N * N + N * D) * 4     # qkv / score / prob / acc (f32)
                + (4 << 20))                              # slack
        vmem_limit_bytes = int(min(max(need, 32 << 20), int(cap * 0.75)))

    kernel = functools.partial(_attention_kernel, heads=heads, head_dim=d)

    return pl.pallas_call(
        kernel,
        out_shape=jax.ShapeDtypeStruct((B, N, D), out_dtype),
        grid_spec=pltpu.PrefetchScalarGridSpec(
            num_scalar_prefetch=0,
            grid=(B,),
            in_specs=[
                pl.BlockSpec((1, N, D), lambda b: (b, 0, 0)),        # x (per batch element)
                pl.BlockSpec((D, 3 * D), lambda b: (0, 0)),          # fused Wqkv, VMEM-resident
                pl.BlockSpec((heads, d, D), lambda b: (0, 0, 0)),    # Wo head slabs, VMEM-resident
                pl.BlockSpec((1, D), lambda b: (0, 0)),              # output bias, VMEM-resident
            ],
            out_specs=pl.BlockSpec((1, N, D), lambda b: (b, 0, 0)),
        ),
        compiler_params=pltpu.CompilerParams(
            dimension_semantics=("parallel",),
            vmem_limit_bytes=vmem_limit_bytes,
        ),
    )(x_c, wqkv, wo_h, bo2)


def attention_reference(x, wq, wk, wv, sel, wo, bo, *, heads):
    """Pure-JAX reference mirroring the PyTorch forward (mask=None, eval)."""
    B, N, D = x.shape
    d = D // heads
    scale = float(D) ** -0.5
    q = (x @ wq) * sel
    k = (x @ wk) * sel
    v = (x @ wv) * sel

    def split(t):  # (B, N, D) -> (B, H, N, d)
        return t.reshape(B, N, heads, d).transpose(0, 2, 1, 3)

    q, k, v = split(q), split(k), split(v)
    dots = jnp.einsum('bhid,bhjd->bhij', q, k) * scale
    attn = jax.nn.softmax(dots, axis=-1)
    out = jnp.einsum('bhij,bhjd->bhid', attn, v)
    out = out.transpose(0, 2, 1, 3).reshape(B, N, D)
    return out @ wo + bo


if __name__ == "__main__":
    B, N, DIM, HEADS = 2, 8, 32, 8

    key = jax.random.PRNGKey(0)
    kx, kq, kk, kv, ko, kb = jax.random.split(key, 6)

    x = jax.random.normal(kx, (B, N, DIM), dtype=jnp.float32)
    # Deterministic parameter init (shapes from the module __init__).
    wq = jax.random.normal(kq, (DIM, DIM), dtype=jnp.float32) * 0.05
    wk = jax.random.normal(kk, (DIM, DIM), dtype=jnp.float32) * 0.05
    wv = jax.random.normal(kv, (DIM, DIM), dtype=jnp.float32) * 0.05
    wo = jax.random.normal(ko, (DIM, DIM), dtype=jnp.float32) * 0.05
    bo = jax.random.normal(kb, (DIM,), dtype=jnp.float32) * 0.05
    sel = jnp.ones((DIM,), dtype=jnp.float32)   # channel_selection init: all ones

    ref = attention_reference(x, wq, wk, wv, sel, wo, bo, heads=HEADS)

    # f32 path: tight correctness check.
    out = attention_forward(x, wq, wk, wv, sel, wo, bo, heads=HEADS)
    out = jax.block_until_ready(out)
    assert out.shape == (B, N, DIM)
    assert jnp.allclose(out, ref, atol=3e-3, rtol=3e-3), "f32 kernel mismatch vs reference"

    # bf16 MXU-input + bf16 output path (all generations): f32 accumulation,
    # looser tolerance.
    out_bf16 = attention_forward(x, wq, wk, wv, sel, wo, bo, heads=HEADS,
                                 compute_dtype=jnp.bfloat16,
                                 out_dtype=jnp.bfloat16)
    out_bf16 = jax.block_until_ready(out_bf16)
    assert out_bf16.shape == (B, N, DIM)
    assert out_bf16.dtype == jnp.bfloat16
    assert jnp.allclose(out_bf16.astype(jnp.float32), ref, atol=5e-2, rtol=5e-2), \
        "bf16 kernel mismatch vs reference"

    print("KERNEL_OK")
</pallas_src>

<mosaic_0001>
module attributes {stable_mosaic.version = 11 : i64} {
  func.func @_attention_kernel(%arg0: i32, %arg1: memref<1x8x32xf32, #tpu.memory_space<vmem>>, %arg2: memref<32x96xf32, #tpu.memory_space<vmem>>, %arg3: memref<8x4x32xf32, #tpu.memory_space<vmem>>, %arg4: memref<1x32xf32, #tpu.memory_space<vmem>>, %arg5: memref<1x8x32xf32, #tpu.memory_space<vmem>>) attributes {dimension_semantics = [#tpu.dimension_semantics<parallel>], iteration_bounds = array<i64: 2>, scalar_prefetch = 0 : i64, scratch_operands = 0 : i64, tpu.core_type = #tpu.core_type<tc>, window_params = [{transform_indices = @transform_0, window_bounds = array<i64: 1, 8, 32>}, {pipeline_mode = #tpu.pipeline_mode<synchronous>, transform_indices = @transform_1, window_bounds = array<i64: 32, 96>}, {pipeline_mode = #tpu.pipeline_mode<synchronous>, transform_indices = @transform_2, window_bounds = array<i64: 8, 4, 32>}, {pipeline_mode = #tpu.pipeline_mode<synchronous>, transform_indices = @transform_3, window_bounds = array<i64: 1, 32>}, {transform_indices = @transform_4, window_bounds = array<i64: 1, 8, 32>}]} {
    %c0 = arith.constant 0 : index
    %c0_0 = arith.constant 0 : index
    %c0_1 = arith.constant 0 : index
    %0 = vector.load %arg1[%c0, %c0_0, %c0_1] : memref<1x8x32xf32, #tpu.memory_space<vmem>>, vector<1x8x32xf32>
    %1 = vector.shape_cast %0 : vector<1x8x32xf32> to vector<8x32xf32>
    %c0_2 = arith.constant 0 : index
    %c0_3 = arith.constant 0 : index
    %2 = vector.load %arg2[%c0_2, %c0_3] : memref<32x96xf32, #tpu.memory_space<vmem>>, vector<32x96xf32>
    %cst = arith.constant dense<0.000000e+00> : vector<8x96xf32>
    %3 = tpu.matmul %1, %2, %cst {dimension_numbers = #tpu.dot_dimension_numbers<[1], [0], [0], [1], [0, 0, 1, 1], [], []>} : vector<8x32xf32>, vector<32x96xf32>, vector<8x96xf32> -> vector<8x96xf32>
    %cst_4 = arith.constant 0.000000e+00 : f32
    %4 = vector.broadcast %cst_4 : f32 to vector<8x32xf32>
    %5 = vector.extract_strided_slice %3 {offsets = [0, 0], sizes = [8, 4], strides = [1, 1]} : vector<8x96xf32> to vector<8x4xf32>
    %6 = vector.extract_strided_slice %3 {offsets = [0, 32], sizes = [8, 4], strides = [1, 1]} : vector<8x96xf32> to vector<8x4xf32>
    %7 = vector.extract_strided_slice %3 {offsets = [0, 64], sizes = [8, 4], strides = [1, 1]} : vector<8x96xf32> to vector<8x4xf32>
    %cst_5 = arith.constant dense<0.000000e+00> : vector<8x8xf32>
    %8 = tpu.matmul %5, %6, %cst_5 {dimension_numbers = #tpu.dot_dimension_numbers<[1], [1], [0], [0], [0, 0, 1, 0], [], []>} : vector<8x4xf32>, vector<8x4xf32>, vector<8x8xf32> -> vector<8x8xf32>
    %cst_6 = arith.constant dense<0xFF800000> : vector<8xf32>
    %9 = vector.multi_reduction <maximumf>, %8, %cst_6 [1] : vector<8x8xf32> to vector<8xf32>
    %10 = vector.shape_cast %9 : vector<8xf32> to vector<8x1xf32>
    %11 = vector.broadcast %10 : vector<8x1xf32> to vector<8x8xf32>
    %12 = arith.subf %8, %11 : vector<8x8xf32>
    %13 = math.exp %12 : vector<8x8xf32>
    %cst_7 = arith.constant dense<0.000000e+00> : vector<8xf32>
    %14 = vector.multi_reduction <add>, %13, %cst_7 [1] : vector<8x8xf32> to vector<8xf32>
    %15 = vector.shape_cast %14 : vector<8xf32> to vector<8x1xf32>
    %16 = tpu.reciprocal %15 {approx = true} : vector<8x1xf32> -> vector<8x1xf32>
    %17 = vector.broadcast %16 : vector<8x1xf32> to vector<8x8xf32>
    %18 = arith.mulf %13, %17 : vector<8x8xf32>
    %cst_8 = arith.constant dense<0.000000e+00> : vector<8x4xf32>
    %19 = tpu.matmul %18, %7, %cst_8 {dimension_numbers = #tpu.dot_dimension_numbers<[1], [0], [0], [1], [0, 0, 1, 1], [], []>} : vector<8x8xf32>, vector<8x4xf32>, vector<8x4xf32> -> vector<8x4xf32>
    %c0_9 = arith.constant 0 : index
    %c0_10 = arith.constant 0 : index
    %c0_11 = arith.constant 0 : index
    %20 = vector.load %arg3[%c0_9, %c0_10, %c0_11] : memref<8x4x32xf32, #tpu.memory_space<vmem>>, vector<1x4x32xf32>
    %21 = vector.shape_cast %20 : vector<1x4x32xf32> to vector<4x32xf32>
    %cst_12 = arith.constant dense<0.000000e+00> : vector<8x32xf32>
    %22 = tpu.matmul %19, %21, %cst_12 {dimension_numbers = #tpu.dot_dimension_numbers<[1], [0], [0], [1], [0, 0, 1, 1], [], []>} : vector<8x4xf32>, vector<4x32xf32>, vector<8x32xf32> -> vector<8x32xf32>
    %23 = arith.addf %4, %22 : vector<8x32xf32>
    %24 = vector.extract_strided_slice %3 {offsets = [0, 4], sizes = [8, 4], strides = [1, 1]} : vector<8x96xf32> to vector<8x4xf32>
    %25 = vector.extract_strided_slice %3 {offsets = [0, 36], sizes = [8, 4], strides = [1, 1]} : vector<8x96xf32> to vector<8x4xf32>
    %26 = vector.extract_strided_slice %3 {offsets = [0, 68], sizes = [8, 4], strides = [1, 1]} : vector<8x96xf32> to vector<8x4xf32>
    %cst_13 = arith.constant dense<0.000000e+00> : vector<8x8xf32>
    %27 = tpu.matmul %24, %25, %cst_13 {dimension_numbers = #tpu.dot_dimension_numbers<[1], [1], [0], [0], [0, 0, 1, 0], [], []>} : vector<8x4xf32>, vector<8x4xf32>, vector<8x8xf32> -> vector<8x8xf32>
    %cst_14 = arith.constant dense<0xFF800000> : vector<8xf32>
    %28 = vector.multi_reduction <maximumf>, %27, %cst_14 [1] : vector<8x8xf32> to vector<8xf32>
    %29 = vector.shape_cast %28 : vector<8xf32> to vector<8x1xf32>
    %30 = vector.broadcast %29 : vector<8x1xf32> to vector<8x8xf32>
    %31 = arith.subf %27, %30 : vector<8x8xf32>
    %32 = math.exp %31 : vector<8x8xf32>
    %cst_15 = arith.constant dense<0.000000e+00> : vector<8xf32>
    %33 = vector.multi_reduction <add>, %32, %cst_15 [1] : vector<8x8xf32> to vector<8xf32>
    %34 = vector.shape_cast %33 : vector<8xf32> to vector<8x1xf32>
    %35 = tpu.reciprocal %34 {approx = true} : vector<8x1xf32> -> vector<8x1xf32>
    %36 = vector.broadcast %35 : vector<8x1xf32> to vector<8x8xf32>
    %37 = arith.mulf %32, %36 : vector<8x8xf32>
    %cst_16 = arith.constant dense<0.000000e+00> : vector<8x4xf32>
    %38 = tpu.matmul %37, %26, %cst_16 {dimension_numbers = #tpu.dot_dimension_numbers<[1], [0], [0], [1], [0, 0, 1, 1], [], []>} : vector<8x8xf32>, vector<8x4xf32>, vector<8x4xf32> -> vector<8x4xf32>
    %c1 = arith.constant 1 : index
    %c0_17 = arith.constant 0 : index
    %c0_18 = arith.constant 0 : index
    %39 = vector.load %arg3[%c1, %c0_17, %c0_18] : memref<8x4x32xf32, #tpu.memory_space<vmem>>, vector<1x4x32xf32>
    %40 = vector.shape_cast %39 : vector<1x4x32xf32> to vector<4x32xf32>
    %cst_19 = arith.constant dense<0.000000e+00> : vector<8x32xf32>
    %41 = tpu.matmul %38, %40, %cst_19 {dimension_numbers = #tpu.dot_dimension_numbers<[1], [0], [0], [1], [0, 0, 1, 1], [], []>} : vector<8x4xf32>, vector<4x32xf32>, vector<8x32xf32> -> vector<8x32xf32>
    %42 = arith.addf %23, %41 : vector<8x32xf32>
    %43 = vector.extract_strided_slice %3 {offsets = [0, 8], sizes = [8, 4], strides = [1, 1]} : vector<8x96xf32> to vector<8x4xf32>
    %44 = vector.extract_strided_slice %3 {offsets = [0, 40], sizes = [8, 4], strides = [1, 1]} : vector<8x96xf32> to vector<8x4xf32>
    %45 = vector.extract_strided_slice %3 {offsets = [0, 72], sizes = [8, 4], strides = [1, 1]} : vector<8x96xf32> to vector<8x4xf32>
    %cst_20 = arith.constant dense<0.000000e+00> : vector<8x8xf32>
    %46 = tpu.matmul %43, %44, %cst_20 {dimension_numbers = #tpu.dot_dimension_numbers<[1], [1], [0], [0], [0, 0, 1, 0], [], []>} : vector<8x4xf32>, vector<8x4xf32>, vector<8x8xf32> -> vector<8x8xf32>
    %cst_21 = arith.constant dense<0xFF800000> : vector<8xf32>
    %47 = vector.multi_reduction <maximumf>, %46, %cst_21 [1] : vector<8x8xf32> to vector<8xf32>
    %48 = vector.shape_cast %47 : vector<8xf32> to vector<8x1xf32>
    %49 = vector.broadcast %48 : vector<8x1xf32> to vector<8x8xf32>
    %50 = arith.subf %46, %49 : vector<8x8xf32>
    %51 = math.exp %50 : vector<8x8xf32>
    %cst_22 = arith.constant dense<0.000000e+00> : vector<8xf32>
    %52 = vector.multi_reduction <add>, %51, %cst_22 [1] : vector<8x8xf32> to vector<8xf32>
    %53 = vector.shape_cast %52 : vector<8xf32> to vector<8x1xf32>
    %54 = tpu.reciprocal %53 {approx = true} : vector<8x1xf32> -> vector<8x1xf32>
    %55 = vector.broadcast %54 : vector<8x1xf32> to vector<8x8xf32>
    %56 = arith.mulf %51, %55 : vector<8x8xf32>
    %cst_23 = arith.constant dense<0.000000e+00> : vector<8x4xf32>
    %57 = tpu.matmul %56, %45, %cst_23 {dimension_numbers = #tpu.dot_dimension_numbers<[1], [0], [0], [1], [0, 0, 1, 1], [], []>} : vector<8x8xf32>, vector<8x4xf32>, vector<8x4xf32> -> vector<8x4xf32>
    %c2 = arith.constant 2 : index
    %c0_24 = arith.constant 0 : index
    %c0_25 = arith.constant 0 : index
    %58 = vector.load %arg3[%c2, %c0_24, %c0_25] : memref<8x4x32xf32, #tpu.memory_space<vmem>>, vector<1x4x32xf32>
    %59 = vector.shape_cast %58 : vector<1x4x32xf32> to vector<4x32xf32>
    %cst_26 = arith.constant dense<0.000000e+00> : vector<8x32xf32>
    %60 = tpu.matmul %57, %59, %cst_26 {dimension_numbers = #tpu.dot_dimension_numbers<[1], [0], [0], [1], [0, 0, 1, 1], [], []>} : vector<8x4xf32>, vector<4x32xf32>, vector<8x32xf32> -> vector<8x32xf32>
    %61 = arith.addf %42, %60 : vector<8x32xf32>
    %62 = vector.extract_strided_slice %3 {offsets = [0, 12], sizes = [8, 4], strides = [1, 1]} : vector<8x96xf32> to vector<8x4xf32>
    %63 = vector.extract_strided_slice %3 {offsets = [0, 44], sizes = [8, 4], strides = [1, 1]} : vector<8x96xf32> to vector<8x4xf32>
    %64 = vector.extract_strided_slice %3 {offsets = [0, 76], sizes = [8, 4], strides = [1, 1]} : vector<8x96xf32> to vector<8x4xf32>
    %cst_27 = arith.constant dense<0.000000e+00> : vector<8x8xf32>
    %65 = tpu.matmul %62, %63, %cst_27 {dimension_numbers = #tpu.dot_dimension_numbers<[1], [1], [0], [0], [0, 0, 1, 0], [], []>} : vector<8x4xf32>, vector<8x4xf32>, vector<8x8xf32> -> vector<8x8xf32>
    %cst_28 = arith.constant dense<0xFF800000> : vector<8xf32>
    %66 = vector.multi_reduction <maximumf>, %65, %cst_28 [1] : vector<8x8xf32> to vector<8xf32>
    %67 = vector.shape_cast %66 : vector<8xf32> to vector<8x1xf32>
    %68 = vector.broadcast %67 : vector<8x1xf32> to vector<8x8xf32>
    %69 = arith.subf %65, %68 : vector<8x8xf32>
    %70 = math.exp %69 : vector<8x8xf32>
    %cst_29 = arith.constant dense<0.000000e+00> : vector<8xf32>
    %71 = vector.multi_reduction <add>, %70, %cst_29 [1] : vector<8x8xf32> to vector<8xf32>
    %72 = vector.shape_cast %71 : vector<8xf32> to vector<8x1xf32>
    %73 = tpu.reciprocal %72 {approx = true} : vector<8x1xf32> -> vector<8x1xf32>
    %74 = vector.broadcast %73 : vector<8x1xf32> to vector<8x8xf32>
    %75 = arith.mulf %70, %74 : vector<8x8xf32>
    %cst_30 = arith.constant dense<0.000000e+00> : vector<8x4xf32>
    %76 = tpu.matmul %75, %64, %cst_30 {dimension_numbers = #tpu.dot_dimension_numbers<[1], [0], [0], [1], [0, 0, 1, 1], [], []>} : vector<8x8xf32>, vector<8x4xf32>, vector<8x4xf32> -> vector<8x4xf32>
    %c3 = arith.constant 3 : index
    %c0_31 = arith.constant 0 : index
    %c0_32 = arith.constant 0 : index
    %77 = vector.load %arg3[%c3, %c0_31, %c0_32] : memref<8x4x32xf32, #tpu.memory_space<vmem>>, vector<1x4x32xf32>
    %78 = vector.shape_cast %77 : vector<1x4x32xf32> to vector<4x32xf32>
    %cst_33 = arith.constant dense<0.000000e+00> : vector<8x32xf32>
    %79 = tpu.matmul %76, %78, %cst_33 {dimension_numbers = #tpu.dot_dimension_numbers<[1], [0], [0], [1], [0, 0, 1, 1], [], []>} : vector<8x4xf32>, vector<4x32xf32>, vector<8x32xf32> -> vector<8x32xf32>
    %80 = arith.addf %61, %79 : vector<8x32xf32>
    %81 = vector.extract_strided_slice %3 {offsets = [0, 16], sizes = [8, 4], strides = [1, 1]} : vector<8x96xf32> to vector<8x4xf32>
    %82 = vector.extract_strided_slice %3 {offsets = [0, 48], sizes = [8, 4], strides = [1, 1]} : vector<8x96xf32> to vector<8x4xf32>
    %83 = vector.extract_strided_slice %3 {offsets = [0, 80], sizes = [8, 4], strides = [1, 1]} : vector<8x96xf32> to vector<8x4xf32>
    %cst_34 = arith.constant dense<0.000000e+00> : vector<8x8xf32>
    %84 = tpu.matmul %81, %82, %cst_34 {dimension_numbers = #tpu.dot_dimension_numbers<[1], [1], [0], [0], [0, 0, 1, 0], [], []>} : vector<8x4xf32>, vector<8x4xf32>, vector<8x8xf32> -> vector<8x8xf32>
    %cst_35 = arith.constant dense<0xFF800000> : vector<8xf32>
    %85 = vector.multi_reduction <maximumf>, %84, %cst_35 [1] : vector<8x8xf32> to vector<8xf32>
    %86 = vector.shape_cast %85 : vector<8xf32> to vector<8x1xf32>
    %87 = vector.broadcast %86 : vector<8x1xf32> to vector<8x8xf32>
    %88 = arith.subf %84, %87 : vector<8x8xf32>
    %89 = math.exp %88 : vector<8x8xf32>
    %cst_36 = arith.constant dense<0.000000e+00> : vector<8xf32>
    %90 = vector.multi_reduction <add>, %89, %cst_36 [1] : vector<8x8xf32> to vector<8xf32>
    %91 = vector.shape_cast %90 : vector<8xf32> to vector<8x1xf32>
    %92 = tpu.reciprocal %91 {approx = true} : vector<8x1xf32> -> vector<8x1xf32>
    %93 = vector.broadcast %92 : vector<8x1xf32> to vector<8x8xf32>
    %94 = arith.mulf %89, %93 : vector<8x8xf32>
    %cst_37 = arith.constant dense<0.000000e+00> : vector<8x4xf32>
    %95 = tpu.matmul %94, %83, %cst_37 {dimension_numbers = #tpu.dot_dimension_numbers<[1], [0], [0], [1], [0, 0, 1, 1], [], []>} : vector<8x8xf32>, vector<8x4xf32>, vector<8x4xf32> -> vector<8x4xf32>
    %c4 = arith.constant 4 : index
    %c0_38 = arith.constant 0 : index
    %c0_39 = arith.constant 0 : index
    %96 = vector.load %arg3[%c4, %c0_38, %c0_39] : memref<8x4x32xf32, #tpu.memory_space<vmem>>, vector<1x4x32xf32>
    %97 = vector.shape_cast %96 : vector<1x4x32xf32> to vector<4x32xf32>
    %cst_40 = arith.constant dense<0.000000e+00> : vector<8x32xf32>
    %98 = tpu.matmul %95, %97, %cst_40 {dimension_numbers = #tpu.dot_dimension_numbers<[1], [0], [0], [1], [0, 0, 1, 1], [], []>} : vector<8x4xf32>, vector<4x32xf32>, vector<8x32xf32> -> vector<8x32xf32>
    %99 = arith.addf %80, %98 : vector<8x32xf32>
    %100 = vector.extract_strided_slice %3 {offsets = [0, 20], sizes = [8, 4], strides = [1, 1]} : vector<8x96xf32> to vector<8x4xf32>
    %101 = vector.extract_strided_slice %3 {offsets = [0, 52], sizes = [8, 4], strides = [1, 1]} : vector<8x96xf32> to vector<8x4xf32>
    %102 = vector.extract_strided_slice %3 {offsets = [0, 84], sizes = [8, 4], strides = [1, 1]} : vector<8x96xf32> to vector<8x4xf32>
    %cst_41 = arith.constant dense<0.000000e+00> : vector<8x8xf32>
    %103 = tpu.matmul %100, %101, %cst_41 {dimension_numbers = #tpu.dot_dimension_numbers<[1], [1], [0], [0], [0, 0, 1, 0], [], []>} : vector<8x4xf32>, vector<8x4xf32>, vector<8x8xf32> -> vector<8x8xf32>
    %cst_42 = arith.constant dense<0xFF800000> : vector<8xf32>
    %104 = vector.multi_reduction <maximumf>, %103, %cst_42 [1] : vector<8x8xf32> to vector<8xf32>
    %105 = vector.shape_cast %104 : vector<8xf32> to vector<8x1xf32>
    %106 = vector.broadcast %105 : vector<8x1xf32> to vector<8x8xf32>
    %107 = arith.subf %103, %106 : vector<8x8xf32>
    %108 = math.exp %107 : vector<8x8xf32>
    %cst_43 = arith.constant dense<0.000000e+00> : vector<8xf32>
    %109 = vector.multi_reduction <add>, %108, %cst_43 [1] : vector<8x8xf32> to vector<8xf32>
    %110 = vector.shape_cast %109 : vector<8xf32> to vector<8x1xf32>
    %111 = tpu.reciprocal %110 {approx = true} : vector<8x1xf32> -> vector<8x1xf32>
    %112 = vector.broadcast %111 : vector<8x1xf32> to vector<8x8xf32>
    %113 = arith.mulf %108, %112 : vector<8x8xf32>
    %cst_44 = arith.constant dense<0.000000e+00> : vector<8x4xf32>
    %114 = tpu.matmul %113, %102, %cst_44 {dimension_numbers = #tpu.dot_dimension_numbers<[1], [0], [0], [1], [0, 0, 1, 1], [], []>} : vector<8x8xf32>, vector<8x4xf32>, vector<8x4xf32> -> vector<8x4xf32>
    %c5 = arith.constant 5 : index
    %c0_45 = arith.constant 0 : index
    %c0_46 = arith.constant 0 : index
    %115 = vector.load %arg3[%c5, %c0_45, %c0_46] : memref<8x4x32xf32, #tpu.memory_space<vmem>>, vector<1x4x32xf32>
    %116 = vector.shape_cast %115 : vector<1x4x32xf32> to vector<4x32xf32>
    %cst_47 = arith.constant dense<0.000000e+00> : vector<8x32xf32>
    %117 = tpu.matmul %114, %116, %cst_47 {dimension_numbers = #tpu.dot_dimension_numbers<[1], [0], [0], [1], [0, 0, 1, 1], [], []>} : vector<8x4xf32>, vector<4x32xf32>, vector<8x32xf32> -> vector<8x32xf32>
    %118 = arith.addf %99, %117 : vector<8x32xf32>
    %119 = vector.extract_strided_slice %3 {offsets = [0, 24], sizes = [8, 4], strides = [1, 1]} : vector<8x96xf32> to vector<8x4xf32>
    %120 = vector.extract_strided_slice %3 {offsets = [0, 56], sizes = [8, 4], strides = [1, 1]} : vector<8x96xf32> to vector<8x4xf32>
    %121 = vector.extract_strided_slice %3 {offsets = [0, 88], sizes = [8, 4], strides = [1, 1]} : vector<8x96xf32> to vector<8x4xf32>
    %cst_48 = arith.constant dense<0.000000e+00> : vector<8x8xf32>
    %122 = tpu.matmul %119, %120, %cst_48 {dimension_numbers = #tpu.dot_dimension_numbers<[1], [1], [0], [0], [0, 0, 1, 0], [], []>} : vector<8x4xf32>, vector<8x4xf32>, vector<8x8xf32> -> vector<8x8xf32>
    %cst_49 = arith.constant dense<0xFF800000> : vector<8xf32>
    %123 = vector.multi_reduction <maximumf>, %122, %cst_49 [1] : vector<8x8xf32> to vector<8xf32>
    %124 = vector.shape_cast %123 : vector<8xf32> to vector<8x1xf32>
    %125 = vector.broadcast %124 : vector<8x1xf32> to vector<8x8xf32>
    %126 = arith.subf %122, %125 : vector<8x8xf32>
    %127 = math.exp %126 : vector<8x8xf32>
    %cst_50 = arith.constant dense<0.000000e+00> : vector<8xf32>
    %128 = vector.multi_reduction <add>, %127, %cst_50 [1] : vector<8x8xf32> to vector<8xf32>
    %129 = vector.shape_cast %128 : vector<8xf32> to vector<8x1xf32>
    %130 = tpu.reciprocal %129 {approx = true} : vector<8x1xf32> -> vector<8x1xf32>
    %131 = vector.broadcast %130 : vector<8x1xf32> to vector<8x8xf32>
    %132 = arith.mulf %127, %131 : vector<8x8xf32>
    %cst_51 = arith.constant dense<0.000000e+00> : vector<8x4xf32>
    %133 = tpu.matmul %132, %121, %cst_51 {dimension_numbers = #tpu.dot_dimension_numbers<[1], [0], [0], [1], [0, 0, 1, 1], [], []>} : vector<8x8xf32>, vector<8x4xf32>, vector<8x4xf32> -> vector<8x4xf32>
    %c6 = arith.constant 6 : index
    %c0_52 = arith.constant 0 : index
    %c0_53 = arith.constant 0 : index
    %134 = vector.load %arg3[%c6, %c0_52, %c0_53] : memref<8x4x32xf32, #tpu.memory_space<vmem>>, vector<1x4x32xf32>
    %135 = vector.shape_cast %134 : vector<1x4x32xf32> to vector<4x32xf32>
    %cst_54 = arith.constant dense<0.000000e+00> : vector<8x32xf32>
    %136 = tpu.matmul %133, %135, %cst_54 {dimension_numbers = #tpu.dot_dimension_numbers<[1], [0], [0], [1], [0, 0, 1, 1], [], []>} : vector<8x4xf32>, vector<4x32xf32>, vector<8x32xf32> -> vector<8x32xf32>
    %137 = arith.addf %118, %136 : vector<8x32xf32>
    %138 = vector.extract_strided_slice %3 {offsets = [0, 28], sizes = [8, 4], strides = [1, 1]} : vector<8x96xf32> to vector<8x4xf32>
    %139 = vector.extract_strided_slice %3 {offsets = [0, 60], sizes = [8, 4], strides = [1, 1]} : vector<8x96xf32> to vector<8x4xf32>
    %140 = vector.extract_strided_slice %3 {offsets = [0, 92], sizes = [8, 4], strides = [1, 1]} : vector<8x96xf32> to vector<8x4xf32>
    %cst_55 = arith.constant dense<0.000000e+00> : vector<8x8xf32>
    %141 = tpu.matmul %138, %139, %cst_55 {dimension_numbers = #tpu.dot_dimension_numbers<[1], [1], [0], [0], [0, 0, 1, 0], [], []>} : vector<8x4xf32>, vector<8x4xf32>, vector<8x8xf32> -> vector<8x8xf32>
    %cst_56 = arith.constant dense<0xFF800000> : vector<8xf32>
    %142 = vector.multi_reduction <maximumf>, %141, %cst_56 [1] : vector<8x8xf32> to vector<8xf32>
    %143 = vector.shape_cast %142 : vector<8xf32> to vector<8x1xf32>
    %144 = vector.broadcast %143 : vector<8x1xf32> to vector<8x8xf32>
    %145 = arith.subf %141, %144 : vector<8x8xf32>
    %146 = math.exp %145 : vector<8x8xf32>
    %cst_57 = arith.constant dense<0.000000e+00> : vector<8xf32>
    %147 = vector.multi_reduction <add>, %146, %cst_57 [1] : vector<8x8xf32> to vector<8xf32>
    %148 = vector.shape_cast %147 : vector<8xf32> to vector<8x1xf32>
    %149 = tpu.reciprocal %148 {approx = true} : vector<8x1xf32> -> vector<8x1xf32>
    %150 = vector.broadcast %149 : vector<8x1xf32> to vector<8x8xf32>
    %151 = arith.mulf %146, %150 : vector<8x8xf32>
    %cst_58 = arith.constant dense<0.000000e+00> : vector<8x4xf32>
    %152 = tpu.matmul %151, %140, %cst_58 {dimension_numbers = #tpu.dot_dimension_numbers<[1], [0], [0], [1], [0, 0, 1, 1], [], []>} : vector<8x8xf32>, vector<8x4xf32>, vector<8x4xf32> -> vector<8x4xf32>
    %c7 = arith.constant 7 : index
    %c0_59 = arith.constant 0 : index
    %c0_60 = arith.constant 0 : index
    %153 = vector.load %arg3[%c7, %c0_59, %c0_60] : memref<8x4x32xf32, #tpu.memory_space<vmem>>, vector<1x4x32xf32>
    %154 = vector.shape_cast %153 : vector<1x4x32xf32> to vector<4x32xf32>
    %cst_61 = arith.constant dense<0.000000e+00> : vector<8x32xf32>
    %155 = tpu.matmul %152, %154, %cst_61 {dimension_numbers = #tpu.dot_dimension_numbers<[1], [0], [0], [1], [0, 0, 1, 1], [], []>} : vector<8x4xf32>, vector<4x32xf32>, vector<8x32xf32> -> vector<8x32xf32>
    %156 = arith.addf %137, %155 : vector<8x32xf32>
    %c0_62 = arith.constant 0 : index
    %c0_63 = arith.constant 0 : index
    %157 = vector.load %arg4[%c0_62, %c0_63] : memref<1x32xf32, #tpu.memory_space<vmem>>, vector<1x32xf32>
    %158 = vector.broadcast %157 : vector<1x32xf32> to vector<8x32xf32>
    %159 = arith.addf %156, %158 : vector<8x32xf32>
    %c0_64 = arith.constant 0 : index
    %c0_65 = arith.constant 0 : index
    %c0_66 = arith.constant 0 : index
    %160 = vector.load %arg5[%c0_64, %c0_65, %c0_66] : memref<1x8x32xf32, #tpu.memory_space<vmem>>, vector<1x8x32xf32>
    %161 = vector.shape_cast %160 : vector<1x8x32xf32> to vector<8x32xf32>
    %162 = vector.shape_cast %159 : vector<8x32xf32> to vector<1x8x32xf32>
    tpu.vector_store %arg5[%c0_64, %c0_65, %c0_66], %162 {strides = array<i32>} : memref<1x8x32xf32, #tpu.memory_space<vmem>>, vector<1x8x32xf32>,
    return
  }
  func.func @transform_0(%arg0: i32) -> (i32, i32, i32) {
    %c0_i32 = arith.constant 0 : i32
    %c0_i32_0 = arith.constant 0 : i32
    %c0_i32_1 = arith.constant 0 : i32
    return %arg0, %c0_i32, %c0_i32_0 : i32, i32, i32
  }
  func.func @transform_1(%arg0: i32) -> (i32, i32) {
    %c0_i32 = arith.constant 0 : i32
    %c0_i32_0 = arith.constant 0 : i32
    %c0_i32_1 = arith.constant 0 : i32
    return %c0_i32, %c0_i32_0 : i32, i32
  }
  func.func @transform_2(%arg0: i32) -> (i32, i32, i32) {
    %c0_i32 = arith.constant 0 : i32
    %c0_i32_0 = arith.constant 0 : i32
    %c0_i32_1 = arith.constant 0 : i32
    %c0_i32_2 = arith.constant 0 : i32
    return %c0_i32, %c0_i32_0, %c0_i32_1 : i32, i32, i32
  }
  func.func @transform_3(%arg0: i32) -> (i32, i32) {
    %c0_i32 = arith.constant 0 : i32
    %c0_i32_0 = arith.constant 0 : i32
    %c0_i32_1 = arith.constant 0 : i32
    return %c0_i32, %c0_i32_0 : i32, i32
  }
  func.func @transform_4(%arg0: i32) -> (i32, i32, i32) {
    %c0_i32 = arith.constant 0 : i32
    %c0_i32_0 = arith.constant 0 : i32
    %c0_i32_1 = arith.constant 0 : i32
    return %arg0, %c0_i32, %c0_i32_0 : i32, i32, i32
  }
}

</mosaic_0001>

<llo_original>
// kernel: tpu_custom_call.1
$region0: #{tpu_custom_call.1}
  #allocation0 [shape = 'u32[]', space=smem, size = 0x4, offset = 0x4, fixed_abs, tag = 'smem constant byte address 0x4 - core index']
  #allocation1 [shape = 'u32[144,128]{1,0:T(1,128)}', space=vmem, size = 0x12000, scoped, tag = 'internal scratch']
  %s0 = inlined_call_operand.hbm [shape: f32[2,8,32], index: 0, kind: input, shape index: {}]
  %s1 = inlined_call_operand.hbm [shape: f32[32,96], index: 1, kind: input, shape index: {}]
  %s2 = inlined_call_operand.hbm [shape: f32[8,4,32], index: 2, kind: input, shape index: {}]
  %s3 = inlined_call_operand.vmem [shape: f32[1,32], index: 3, kind: input, shape index: {}]
  %s4 = inlined_call_operand.hbm [shape: f32[2,8,32], index: 4, kind: output, shape index: {}]
  %s5 = sld [smem:[#allocation0]]
  $region61: #{tpu_custom_call.1} parent=0
    _
  %s7 = ssub.s32 1, %s5
  %s8 = scalar_select 0, %s7, %s5
  $region1: #{tpu_custom_call.1} parent=0
    #allocation2 [shape = 'u8[8192]{0}', space=vmem, size = 0x2000, scoped, tag = 'input window, operand 0']
    #allocation3 [shape = 's32[2]{0}', space=sflag, size = 0x8, scoped, tag = 'scoped memory for tpu_custom_call.1']
    #allocation4 [shape = 's32[2]{0}', space=sflag, size = 0x8, scoped, tag = 'scoped memory for tpu_custom_call.1']
    #allocation5 [shape = 'u8[16384]{0}', space=vmem, size = 0x4000, scoped, tag = 'input window, operand 1, single buffered']
    #allocation6 [shape = 's32[1]{0}', space=sflag, size = 0x4, scoped, tag = 'scoped memory for tpu_custom_call.1']
    #allocation7 [shape = 'u8[16384]{0}', space=vmem, size = 0x4000, scoped, tag = 'input window, operand 2, single buffered']
    #allocation8 [shape = 'u8[8192]{0}', space=vmem, size = 0x2000, scoped, tag = 'output window, operand 0']
    %9 = vsyncpa [#allocation3], 0
    %s10 = scalar_lea.sflag [#allocation3], 1
    %11 = vsyncpa %s10, 0
    %12 = vsyncpa [#allocation6], 0
    %13 = vsyncpa [#allocation4], 0
    %s14 = scalar_lea.sflag [#allocation4], 1
    %15 = vsyncpa %s14, 0
    loop: start=0, step=1, limit=4
    $region2: #{tpu_custom_call.1} parent=1 // loop_pre_header
      _
    $region3: #{tpu_custom_call.1} parent=1 // loop_header
      %s17 = sphi 0, %s21
      %p18 = scmp.ge.s32.totalorder %s17, 4
      %s27 = sphi 0, %s29
      %s30 = sphi 0, %s27
      %s31 = sphi 0, %s30
      %s47 = sphi 0, %s31
      %s51 = sphi 0, %s51
      %s53 = sphi 0, %s51
      %s54 = sphi 0, %s53
      %s68 = sphi 0, %s54
      %s72 = sphi 0, %s72
      %s74 = sphi 0, %s72
      %s75 = sphi 0, %s74
      %s89 = sphi 0, %s75
      %s93 = sphi 0, %s93
      %s95 = sphi 0, %s93
      %s96 = sphi 0, %s95
      %s110 = sphi 0, %s96
      %s116 = sphi 0, %s118
      %s119 = sphi 0, %s116
      %s120 = sphi 0, %s119
      %s136 = sphi 0, %s120
    $region4: #{tpu_custom_call.1} parent=1 // loop_header_branch
      %20 = sbr.rel (%p18) target = $region8
    $region5: #{tpu_custom_call.1} parent=1 // loop_body
      %s22 = ssub.s32 %s17, 1
      %s23 = ssub.s32 %s17, 2
      %s24 = sadd.s32 %s17, 1
      %s25 = ssub.s32 %s17, %s24
      %p26 = scmp.eq.s32.totalorder %s25, 0
      %s28 = sadd.s32 %s27, 1
      %s29 = scalar_select %p26, %s27, %s28
      %p32 = pneg %p26
      %p33 = scmp.eq.s32.totalorder %s17, 1
      %p34 = por %p32, %p33
      %p35 = scmp.ne.s32.totalorder %s27, %s30
      %p36 = scmp.eq.s32.totalorder %s17, 0
      %p37 = por %p35, %p36
      %p38 = scmp.ne.s32.totalorder %s27, %s30
      %p39 = scmp.eq.s32.totalorder %s22, 1
      %p40 = por %p38, %p39
      %p41 = scmp.ne.s32.totalorder %s30, %s31
      %p42 = scmp.eq.s32.totalorder %s22, 0
      %p43 = por %p41, %p42
      %p44 = scmp.ne.s32.totalorder %s30, %s31
      %p45 = scmp.eq.s32.totalorder %s23, 1
      %p46 = por %p44, %p45
      %p48 = scmp.ne.s32.totalorder %s31, %s47
      %p49 = scmp.eq.s32.totalorder %s23, 0
      %p50 = por %p48, %p49
      %s52 = sadd.s32 %s51, 1
      %p55 = scmp.eq.s32.totalorder %s17, 1
      %p56 = scmp.ne.s32.totalorder %s51, %s53
      %p57 = scmp.eq.s32.totalorder %s17, 0
      %p58 = por %p56, %p57
      %p59 = scmp.ne.s32.totalorder %s51, %s53
      %p60 = scmp.eq.s32.totalorder %s22, 1
      %p61 = por %p59, %p60
      %p62 = scmp.ne.s32.totalorder %s53, %s54
      %p63 = scmp.eq.s32.totalorder %s22, 0
      %p64 = por %p62, %p63
      %p65 = scmp.ne.s32.totalorder %s53, %s54
      %p66 = scmp.eq.s32.totalorder %s23, 1
      %p67 = por %p65, %p66
      %p69 = scmp.ne.s32.totalorder %s54, %s68
      %p70 = scmp.eq.s32.totalorder %s23, 0
      %p71 = por %p69, %p70
      %s73 = sadd.s32 %s72, 1
      %p76 = scmp.eq.s32.totalorder %s17, 1
      %p77 = scmp.ne.s32.totalorder %s72, %s74
      %p78 = scmp.eq.s32.totalorder %s17, 0
      %p79 = por %p77, %p78
      %p80 = scmp.ne.s32.totalorder %s72, %s74
      %p81 = scmp.eq.s32.totalorder %s22, 1
      %p82 = por %p80, %p81
      %p83 = scmp.ne.s32.totalorder %s74, %s75
      %p84 = scmp.eq.s32.totalorder %s22, 0
      %p85 = por %p83, %p84
      %p86 = scmp.ne.s32.totalorder %s74, %s75
      %p87 = scmp.eq.s32.totalorder %s23, 1
      %p88 = por %p86, %p87
      %p90 = scmp.ne.s32.totalorder %s75, %s89
      %p91 = scmp.eq.s32.totalorder %s23, 0
      %p92 = por %p90, %p91
      %s94 = sadd.s32 %s93, 1
      %p97 = scmp.eq.s32.totalorder %s17, 1
      %p98 = scmp.ne.s32.totalorder %s93, %s95
      %p99 = scmp.eq.s32.totalorder %s17, 0
      %p100 = por %p98, %p99
      %p101 = scmp.ne.s32.totalorder %s93, %s95
      %p102 = scmp.eq.s32.totalorder %s22, 1
      %p103 = por %p101, %p102
      %p104 = scmp.ne.s32.totalorder %s95, %s96
      %p105 = scmp.eq.s32.totalorder %s22, 0
      %p106 = por %p104, %p105
      %p107 = scmp.ne.s32.totalorder %s95, %s96
      %p108 = scmp.eq.s32.totalorder %s23, 1
      %p109 = por %p107, %p108
      %p111 = scmp.ne.s32.totalorder %s96, %s110
      %p112 = scmp.eq.s32.totalorder %s23, 0
      %p113 = por %p111, %p112
      %s114 = ssub.s32 %s17, %s24
      %p115 = scmp.eq.s32.totalorder %s114, 0
      %s117 = sadd.s32 %s116, 1
      %s118 = scalar_select %p115, %s116, %s117
      %p121 = pneg %p115
      %p122 = scmp.eq.s32.totalorder %s17, 1
      %p123 = por %p121, %p122
      %p124 = scmp.ne.s32.totalorder %s116, %s119
      %p125 = scmp.eq.s32.totalorder %s17, 0
      %p126 = por %p124, %p125
      %p127 = scmp.ne.s32.totalorder %s116, %s119
      %p128 = scmp.eq.s32.totalorder %s22, 1
      %p129 = por %p127, %p128
      %p130 = scmp.ne.s32.totalorder %s119, %s120
      %p131 = scmp.eq.s32.totalorder %s22, 0
      %p132 = por %p130, %p131
      %p133 = scmp.ne.s32.totalorder %s119, %s120
      %p134 = scmp.eq.s32.totalorder %s23, 1
      %p135 = por %p133, %p134
      %p137 = scmp.ne.s32.totalorder %s120, %s136
      %p138 = scmp.eq.s32.totalorder %s23, 0
      %p139 = por %p137, %p138
      %p140 = scmp.le.s32.totalorder 1, %s17
      %p141 = scmp.lt.s32.totalorder %s17, 3
      %p142 = pnand %p140, %p141
      %p143 = pneg %p142
      // Predicated region
      $region9: #{tpu_custom_call.1} parent=5 // pred_check
        _
      $region10: #{tpu_custom_call.1} parent=5 // pred_check_branch
        %145 = sbr.rel (%p142) target = $region12
      $region11: #{tpu_custom_call.1} parent=5 // pred_region
        %s146 = ssub.s32 %s17, 1
        // Predicated region
        $region13: #{tpu_custom_call.1} parent=11 // pred_check
          %p147 = pneg %p64
        $region14: #{tpu_custom_call.1} parent=11 // pred_check_branch
          %149 = sbr.rel (%p147) target = $region16
        $region15: #{tpu_custom_call.1} parent=11 // pred_region
          %s151 = ssub.s32 512, 512
          %152 = vsyncadd [#allocation6], %s151
          %s153 = sshll.u32 [#allocation5], 4
          %s154 = int_to_ptr.vmem [resolvable:$true] %s153
          %159 = dma.hbm_to_vmem [thread:$0]  %s1, 512, %s154, [#allocation6], 128, 128, 8
        $region16: #{tpu_custom_call.1} parent=11 // pred_fallthru
          _
        // Predicated region
        $region17: #{tpu_custom_call.1} parent=11 // pred_check
          %p160 = pneg %p85
        $region18: #{tpu_custom_call.1} parent=11 // pred_check_branch
          %162 = sbr.rel (%p160) target = $region20
        $region19: #{tpu_custom_call.1} parent=11 // pred_region
          %s164 = ssub.s32 512, 512
          %165 = vsyncadd [#allocation6], %s164
          %s166 = sshll.u32 [#allocation7], 4
          %s167 = int_to_ptr.vmem [resolvable:$true] %s166
          %172 = dma.hbm_to_vmem [thread:$0]  %s2, 512, %s167, [#allocation6], 64, 64, 4
        $region20: #{tpu_custom_call.1} parent=11 // pred_fallthru
          _
        // Predicated region
        $region21: #{tpu_custom_call.1} parent=11 // pred_check
          %p173 = pneg %p106
        $region22: #{tpu_custom_call.1} parent=11 // pred_check_branch
          %175 = sbr.rel (%p173) target = $region24
        $region23: #{tpu_custom_call.1} parent=11 // pred_region
          _
        $region24: #{tpu_custom_call.1} parent=11 // pred_fallthru
          _
      $region12: #{tpu_custom_call.1} parent=5 // pred_fallthru
        _
      %p176 = scmp.lt.s32.totalorder %s17, 2
      // Predicated region
      $region25: #{tpu_custom_call.1} parent=5 // pred_check
        %p177 = pneg %p176
      $region26: #{tpu_custom_call.1} parent=5 // pred_check_branch
        %179 = sbr.rel (%p177) target = $region28
      $region27: #{tpu_custom_call.1} parent=5 // pred_region
        // Predicated region
        $region29: #{tpu_custom_call.1} parent=27 // pred_check
          %p180 = pneg %p37
        $region30: #{tpu_custom_call.1} parent=27 // pred_check_branch
          %182 = sbr.rel (%p180) target = $region32
        $region31: #{tpu_custom_call.1} parent=27 // pred_region
          %s183 = sand.u32 %s27, 1
          %s184 = scalar_lea.sflag [#allocation3], %s183
          %s185 = sand.u32 %s27, 1
          %s186 = smul.addr %s185, 8
          %s187 = scalar_lea.vmem [#allocation2], %s186
          %s189 = ssub.s32 128, 128
          %190 = vsyncadd %s184, %s189
          %s191 = smul.addr %s17, 128
          %s192 = scalar_lea.hbm %s0, %s191
          %s194 = sshll.u32 %s187, 4
          %s195 = int_to_ptr.vmem [resolvable:$true] %s194
          %197 = dma.hbm_to_vmem [thread:$0]  %s192, 128, %s195, %s184
        $region32: #{tpu_custom_call.1} parent=27 // pred_fallthru
          _
      $region28: #{tpu_custom_call.1} parent=5 // pred_fallthru
        _
      %p198 = scmp.le.s32.totalorder 1, %s17
      %p199 = scmp.lt.s32.totalorder %s17, 3
      %p200 = pnand %p198, %p199
      %p201 = pneg %p200
      // Predicated region
      $region33: #{tpu_custom_call.1} parent=5 // pred_check
        _
      $region34: #{tpu_custom_call.1} parent=5 // pred_check_branch
        %203 = sbr.rel (%p200) target = $region36
      $region35: #{tpu_custom_call.1} parent=5 // pred_region
        %s204 = ssub.s32 %s17, 1
        %s205 = sand.u32 %s30, 1
        %s206 = scalar_lea.sflag [#allocation3], %s205
        %s207 = sand.u32 %s30, 1
        %s208 = smul.addr %s207, 8
        %s209 = scalar_lea.vmem [#allocation2], %s208
        // Predicated region
        $region37: #{tpu_custom_call.1} parent=35 // pred_check
          %p210 = pneg %p43
        $region38: #{tpu_custom_call.1} parent=35 // pred_check_branch
          %212 = sbr.rel (%p210) target = $region40
        $region39: #{tpu_custom_call.1} parent=35 // pred_region
          %213 = dma.done %s206, 128
        $region40: #{tpu_custom_call.1} parent=35 // pred_fallthru
          _
        // Predicated region
        $region41: #{tpu_custom_call.1} parent=35 // pred_check
          %p214 = pneg %p64
        $region42: #{tpu_custom_call.1} parent=35 // pred_check_branch
          %216 = sbr.rel (%p214) target = $region44
        $region43: #{tpu_custom_call.1} parent=35 // pred_region
          %217 = dma.done [#allocation6], 512
        $region44: #{tpu_custom_call.1} parent=35 // pred_fallthru
          _
        // Predicated region
        $region45: #{tpu_custom_call.1} parent=35 // pred_check
          %p218 = pneg %p85
        $region46: #{tpu_custom_call.1} parent=35 // pred_check_branch
          %220 = sbr.rel (%p218) target = $region48
        $region47: #{tpu_custom_call.1} parent=35 // pred_region
          %221 = dma.done [#allocation6], 512
        $region48: #{tpu_custom_call.1} parent=35 // pred_fallthru
          _
        %s222 = sand.u32 %s30, 1
        %s223 = scalar_lea.sflag [#allocation3], %s222
        %s224 = sand.u32 %s30, 1
        %s225 = smul.addr %s224, 8
        %s226 = scalar_lea.vmem [#allocation2], %s225
        %p227 = pneg %p43
        %p228 = pneg %p40
        %p229 = pneg %p64
        %p230 = pneg %p61
        %p231 = pneg %p85
        %p232 = pneg %p82
        %p233 = pneg %p106
        %p234 = pneg %p103
        %p235 = pneg %p132
        %p236 = pneg %p129
        %s237 = sand.u32 %s119, 1
        %s238 = scalar_lea.sflag [#allocation4], %s237
        %s239 = sand.u32 %s119, 1
        %s240 = smul.addr %s239, 8
        %s241 = scalar_lea.vmem [#allocation8], %s240
        %v242 = vld [vmem:[%s209] sm:$0xff]
        %v243 = vld [vmem:[#allocation5] sm:$0xff]
        %v244 = vld [vmem:[#allocation5 + $0x8] sm:$0xff]
        %v245 = vld [vmem:[#allocation5 + $0x10] sm:$0xff]
        %v246 = vld [vmem:[#allocation5 + $0x18] sm:$0xff]
        %vm247 = vcmask 261120
        %v249 = vsel %vm247, %v242, 0
        %251 = vmatprep.subr.mxu0 0.0
        %252 = vmatpush1.msra.mxu0 %v243
        %253 = vmatprep.subr.mxu0 0.0
        %254 = vmatpush1.msra.mxu0 %v244
        %255 = vmatprep.subr.mxu0 0.0
        %256 = vmatpush1.msra.mxu0 %v245
        %257 = vmatprep.subr.mxu0 0.0
        %258 = vmatpush1.msra.mxu0 %v246
        %259 = vmatprep.subr.mxu0 0.0
        %260 = vmatpush1.msra.mxu0 0.0
        %261 = vmatprep.subr.mxu0 0.0
        %262 = vmatpush1.msra.mxu0 0.0
        %263 = vmatprep.subr.mxu0 0.0
        %264 = vmatpush1.msra.mxu0 0.0
        %265 = vmatprep.subr.mxu0 0.0
        %266 = vmatpush1.msra.mxu0 0.0
        %267 = vmatprep.subr.mxu0 0.0
        %268 = vmatpush1.msra.mxu0 0.0
        %269 = vmatprep.subr.mxu0 0.0
        %270 = vmatpush1.msra.mxu0 0.0
        %271 = vmatprep.subr.mxu0 0.0
        %272 = vmatpush1.msra.mxu0 0.0
        %273 = vmatprep.subr.mxu0 0.0
        %274 = vmatpush1.msra.mxu0 0.0
        %275 = vmatprep.subr.mxu0 0.0
        %276 = vmatpush1.msra.mxu0 0.0
        %277 = vmatprep.subr.mxu0 0.0
        %278 = vmatpush1.msra.mxu0 0.0
        %279 = vmatprep.subr.mxu0 0.0
        %280 = vmatpush1.msra.mxu0 0.0
        %281 = vmatprep.subr.mxu0 0.0
        %282 = vmatpush1.msra.mxu0 0.0
        %283 = vmatprep.subr.mxu0 0.0
        %284 = vmatpush1.msra.mxu0 0.0
        %285 = vmatprep.subr.mxu0 0.0
        %286 = vmatpush1.msra.mxu0 0.0
        %287 = vmatprep.subr.mxu0 0.0
        %288 = vmatpush1.msra.mxu0 0.0
        %289 = vmatprep.subr.mxu0 0.0
        %290 = vmatpush1.msra.mxu0 0.0
        %291 = vmatprep.subr.mxu0 0.0
        %292 = vmatpush1.msra.mxu0 0.0
        %293 = vmatprep.subr.mxu0 0.0
        %294 = vmatpush1.msra.mxu0 0.0
        %295 = vmatprep.subr.mxu0 0.0
        %296 = vmatpush1.msra.mxu0 0.0
        %297 = vmatprep.subr.mxu0 0.0
        %298 = vmatpush1.msra.mxu0 0.0
        %299 = vmatprep.subr.mxu0 0.0
        %300 = vmatpush1.msra.mxu0 0.0
        %301 = vmatprep.subr.mxu0 0.0
        %302 = vmatpush1.msra.mxu0 0.0
        %303 = vmatprep.subr.mxu0 0.0
        %304 = vmatpush1.msra.mxu0 0.0
        %305 = vmatprep.subr.mxu0 0.0
        %306 = vmatpush1.msra.mxu0 0.0
        %307 = vmatprep.subr.mxu0 0.0
        %308 = vmatpush1.msra.mxu0 0.0
        %309 = vmatprep.subr.mxu0 0.0
        %310 = vmatpush1.msra.mxu0 0.0
        %311 = vmatprep.subr.mxu0 0.0
        %312 = vmatpush1.msra.mxu0 0.0
        %313 = vmatprep.subr.mxu0 0.0
        %314 = vmatpush1.msra.mxu0 0.0
        %315 = vmatprep.mubr.f32.mxu0 0.0
        %316 = vmatmul.mubr.f32.gmra.mrb[0].mxu0 %v249
        %v317 = vpop.f32.mrb[0].mxu0
        %v318 = vadd.f32 0.0, %v317
        %v319 = vpop.f32.mrb[0].mxu0
        %320 = vdwg.mxu0
        %322 = vrot.lane.b32.xlu0 %v318, 96
        %v323 = vpop.permute.xlu0 %322
        %vm324 = vcmask 31744
        %v325 = vsel %vm324, %v318, 0
        %v327 = vsel %vm324, %v323, 0
        %329 = vmatprep.subr.mxu0 0.0
        %330 = vmatpush1.xpose.msra.mxu0 %v327
        %331 = vmatprep.subr.mxu0 0.0
        %332 = vmatpush1.xpose.msra.mxu0 0.0
        %333 = vmatprep.subr.mxu0 0.0
        %334 = vmatpush1.xpose.msra.mxu0 0.0
        %335 = vmatprep.subr.mxu0 0.0
        %336 = vmatpush1.xpose.msra.mxu0 0.0
        %337 = vmatprep.subr.mxu0 0.0
        %338 = vmatpush1.xpose.msra.mxu0 0.0
        %339 = vmatprep.subr.mxu0 0.0
        %340 = vmatpush1.xpose.msra.mxu0 0.0
        %341 = vmatprep.subr.mxu0 0.0
        %342 = vmatpush1.xpose.msra.mxu0 0.0
        %343 = vmatprep.subr.mxu0 0.0
        %344 = vmatpush1.xpose.msra.mxu0 0.0
        %345 = vmatprep.subr.mxu0 0.0
        %346 = vmatpush1.xpose.msra.mxu0 0.0
        %347 = vmatprep.subr.mxu0 0.0
        %348 = vmatpush1.xpose.msra.mxu0 0.0
        %349 = vmatprep.subr.mxu0 0.0
        %350 = vmatpush1.xpose.msra.mxu0 0.0
        %351 = vmatprep.subr.mxu0 0.0
        %352 = vmatpush1.xpose.msra.mxu0 0.0
        %353 = vmatprep.subr.mxu0 0.0
        %354 = vmatpush1.xpose.msra.mxu0 0.0
        %355 = vmatprep.subr.mxu0 0.0
        %356 = vmatpush1.xpose.msra.mxu0 0.0
        %357 = vmatprep.subr.mxu0 0.0
        %358 = vmatpush1.xpose.msra.mxu0 0.0
        %359 = vmatprep.subr.mxu0 0.0
        %360 = vmatpush1.xpose.msra.mxu0 0.0
        %361 = vmatprep.subr.mxu0 0.0
        %362 = vmatpush1.xpose.msra.mxu0 0.0
        %363 = vmatprep.subr.mxu0 0.0
        %364 = vmatpush1.xpose.msra.mxu0 0.0
        %365 = vmatprep.subr.mxu0 0.0
        %366 = vmatpush1.xpose.msra.mxu0 0.0
        %367 = vmatprep.subr.mxu0 0.0
        %368 = vmatpush1.xpose.msra.mxu0 0.0
        %369 = vmatprep.subr.mxu0 0.0
        %370 = vmatpush1.xpose.msra.mxu0 0.0
        %371 = vmatprep.subr.mxu0 0.0
        %372 = vmatpush1.xpose.msra.mxu0 0.0
        %373 = vmatprep.subr.mxu0 0.0
        %374 = vmatpush1.xpose.msra.mxu0 0.0
        %375 = vmatprep.subr.mxu0 0.0
        %376 = vmatpush1.xpose.msra.mxu0 0.0
        %377 = vmatprep.subr.mxu0 0.0
        %378 = vmatpush1.xpose.msra.mxu0 0.0
        %379 = vmatprep.subr.mxu0 0.0
        %380 = vmatpush1.xpose.msra.mxu0 0.0
        %381 = vmatprep.subr.mxu0 0.0
        %382 = vmatpush1.xpose.msra.mxu0 0.0
        %383 = vmatprep.subr.mxu0 0.0
        %384 = vmatpush1.xpose.msra.mxu0 0.0
        %385 = vmatprep.subr.mxu0 0.0
        %386 = vmatpush1.xpose.msra.mxu0 0.0
        %387 = vmatprep.subr.mxu0 0.0
        %388 = vmatpush1.xpose.msra.mxu0 0.0
        %389 = vmatprep.subr.mxu0 0.0
        %390 = vmatpush1.xpose.msra.mxu0 0.0
        %391 = vmatprep.subr.mxu0 0.0
        %392 = vmatpush1.xpose.msra.mxu0 0.0
        %393 = vmatprep.mubr.f32.mxu0 0.0
        %394 = vmatmul.mubr.f32.gmra.mrb[0].mxu0 %v325
        %v395 = vpop.f32.mrb[0].mxu0
        %v396 = vadd.f32 0.0, %v395
        %v397 = vpop.f32.mrb[0].mxu0
        %398 = vdwg.mxu0
        %vm399 = vcmask 64512
        %v400 = vsel %vm399, %v396, -inf
        %401 = vmax.xlane.f32.xlu0 %v400
        %v402 = vpop.xlane.xlu0 %401
        %v403 = vsub.f32 %v396, %v402
        %v404 = vmul.f32 %v403, 1.442695
        %v405 = vpow.pop %v404
        %v406 = vsel %vm399, %v405, 0.0
        %407 = vadd.xlane.f32.xlu0 %v406
        %v408 = vpop.xlane.xlu0 %407
        %v409 = vrcp.pop %v408
        %v410 = vmul.f32 %v405, %v409
        %411 = vrot.lane.b32.xlu0 %v318, 64
        %v412 = vpop.permute.xlu0 %411
        %v415 = vsel %vm399, %v410, 0
        %417 = vmatprep.subr.mxu0 0.0
        %418 = vmatpush1.msra.mxu0 %v412
        %419 = vmatprep.subr.mxu0 0.0
        %420 = vmatpush1.msra.mxu0 0.0
        %421 = vmatprep.subr.mxu0 0.0
        %422 = vmatpush1.msra.mxu0 0.0
        %423 = vmatprep.subr.mxu0 0.0
        %424 = vmatpush1.msra.mxu0 0.0
        %425 = vmatprep.subr.mxu0 0.0
        %426 = vmatpush1.msra.mxu0 0.0
        %427 = vmatprep.subr.mxu0 0.0
        %428 = vmatpush1.msra.mxu0 0.0
        %429 = vmatprep.subr.mxu0 0.0
        %430 = vmatpush1.msra.mxu0 0.0
        %431 = vmatprep.subr.mxu0 0.0
        %432 = vmatpush1.msra.mxu0 0.0
        %433 = vmatprep.subr.mxu0 0.0
        %434 = vmatpush1.msra.mxu0 0.0
        %435 = vmatprep.subr.mxu0 0.0
        %436 = vmatpush1.msra.mxu0 0.0
        %437 = vmatprep.subr.mxu0 0.0
        %438 = vmatpush1.msra.mxu0 0.0
        %439 = vmatprep.subr.mxu0 0.0
        %440 = vmatpush1.msra.mxu0 0.0
        %441 = vmatprep.subr.mxu0 0.0
        %442 = vmatpush1.msra.mxu0 0.0
        %443 = vmatprep.subr.mxu0 0.0
        %444 = vmatpush1.msra.mxu0 0.0
        %445 = vmatprep.subr.mxu0 0.0
        %446 = vmatpush1.msra.mxu0 0.0
        %447 = vmatprep.subr.mxu0 0.0
        %448 = vmatpush1.msra.mxu0 0.0
        %449 = vmatprep.subr.mxu0 0.0
        %450 = vmatpush1.msra.mxu0 0.0
        %451 = vmatprep.subr.mxu0 0.0
        %452 = vmatpush1.msra.mxu0 0.0
        %453 = vmatprep.subr.mxu0 0.0
        %454 = vmatpush1.msra.mxu0 0.0
        %455 = vmatprep.subr.mxu0 0.0
        %456 = vmatpush1.msra.mxu0 0.0
        %457 = vmatprep.subr.mxu0 0.0
        %458 = vmatpush1.msra.mxu0 0.0
        %459 = vmatprep.subr.mxu0 0.0
        %460 = vmatpush1.msra.mxu0 0.0
        %461 = vmatprep.subr.mxu0 0.0
        %462 = vmatpush1.msra.mxu0 0.0
        %463 = vmatprep.subr.mxu0 0.0
        %464 = vmatpush1.msra.mxu0 0.0
        %465 = vmatprep.subr.mxu0 0.0
        %466 = vmatpush1.msra.mxu0 0.0
        %467 = vmatprep.subr.mxu0 0.0
        %468 = vmatpush1.msra.mxu0 0.0
        %469 = vmatprep.subr.mxu0 0.0
        %470 = vmatpush1.msra.mxu0 0.0
        %471 = vmatprep.subr.mxu0 0.0
        %472 = vmatpush1.msra.mxu0 0.0
        %473 = vmatprep.subr.mxu0 0.0
        %474 = vmatpush1.msra.mxu0 0.0
        %475 = vmatprep.subr.mxu0 0.0
        %476 = vmatpush1.msra.mxu0 0.0
        %477 = vmatprep.subr.mxu0 0.0
        %478 = vmatpush1.msra.mxu0 0.0
        %479 = vmatprep.subr.mxu0 0.0
        %480 = vmatpush1.msra.mxu0 0.0
        %481 = vmatprep.mubr.f32.mxu0 0.0
        %482 = vmatmul.mubr.f32.gmra.mrb[0].mxu0 %v415
        %v483 = vpop.f32.mrb[0].mxu0
        %v484 = vadd.f32 0.0, %v483
        %v485 = vpop.f32.mrb[0].mxu0
        %486 = vdwg.mxu0
        %v487 = vld [vmem:[#allocation7] sm:$0xf]
        %488 = vrot.lane.b32.xlu0 %v318, 124
        %v489 = vpop.permute.xlu0 %488
        %490 = vrot.lane.b32.xlu0 %v318, 92
        %v491 = vpop.permute.xlu0 %490
        %v492 = vsel %vm324, %v489, 0
        %v494 = vsel %vm324, %v491, 0
        %496 = vmatprep.subr.mxu0 0.0
        %497 = vmatpush1.xpose.msra.mxu0 %v494
        %498 = vmatprep.subr.mxu0 0.0
        %499 = vmatpush1.xpose.msra.mxu0 0.0
        %500 = vmatprep.subr.mxu0 0.0
        %501 = vmatpush1.xpose.msra.mxu0 0.0
        %502 = vmatprep.subr.mxu0 0.0
        %503 = vmatpush1.xpose.msra.mxu0 0.0
        %504 = vmatprep.subr.mxu0 0.0
        %505 = vmatpush1.xpose.msra.mxu0 0.0
        %506 = vmatprep.subr.mxu0 0.0
        %507 = vmatpush1.xpose.msra.mxu0 0.0
        %508 = vmatprep.subr.mxu0 0.0
        %509 = vmatpush1.xpose.msra.mxu0 0.0
        %510 = vmatprep.subr.mxu0 0.0
        %511 = vmatpush1.xpose.msra.mxu0 0.0
        %512 = vmatprep.subr.mxu0 0.0
        %513 = vmatpush1.xpose.msra.mxu0 0.0
        %514 = vmatprep.subr.mxu0 0.0
        %515 = vmatpush1.xpose.msra.mxu0 0.0
        %516 = vmatprep.subr.mxu0 0.0
        %517 = vmatpush1.xpose.msra.mxu0 0.0
        %518 = vmatprep.subr.mxu0 0.0
        %519 = vmatpush1.xpose.msra.mxu0 0.0
        %520 = vmatprep.subr.mxu0 0.0
        %521 = vmatpush1.xpose.msra.mxu0 0.0
        %522 = vmatprep.subr.mxu0 0.0
        %523 = vmatpush1.xpose.msra.mxu0 0.0
        %524 = vmatprep.subr.mxu0 0.0
        %525 = vmatpush1.xpose.msra.mxu0 0.0
        %526 = vmatprep.subr.mxu0 0.0
        %527 = vmatpush1.xpose.msra.mxu0 0.0
        %528 = vmatprep.subr.mxu0 0.0
        %529 = vmatpush1.xpose.msra.mxu0 0.0
        %530 = vmatprep.subr.mxu0 0.0
        %531 = vmatpush1.xpose.msra.mxu0 0.0
        %532 = vmatprep.subr.mxu0 0.0
        %533 = vmatpush1.xpose.msra.mxu0 0.0
        %534 = vmatprep.subr.mxu0 0.0
        %535 = vmatpush1.xpose.msra.mxu0 0.0
        %536 = vmatprep.subr.mxu0 0.0
        %537 = vmatpush1.xpose.msra.mxu0 0.0
        %538 = vmatprep.subr.mxu0 0.0
        %539 = vmatpush1.xpose.msra.mxu0 0.0
        %540 = vmatprep.subr.mxu0 0.0
        %541 = vmatpush1.xpose.msra.mxu0 0.0
        %542 = vmatprep.subr.mxu0 0.0
        %543 = vmatpush1.xpose.msra.mxu0 0.0
        %544 = vmatprep.subr.mxu0 0.0
        %545 = vmatpush1.xpose.msra.mxu0 0.0
        %546 = vmatprep.subr.mxu0 0.0
        %547 = vmatpush1.xpose.msra.mxu0 0.0
        %548 = vmatprep.subr.mxu0 0.0
        %549 = vmatpush1.xpose.msra.mxu0 0.0
        %550 = vmatprep.subr.mxu0 0.0
        %551 = vmatpush1.xpose.msra.mxu0 0.0
        %552 = vmatprep.subr.mxu0 0.0
        %553 = vmatpush1.xpose.msra.mxu0 0.0
        %554 = vmatprep.subr.mxu0 0.0
        %555 = vmatpush1.xpose.msra.mxu0 0.0
        %556 = vmatprep.subr.mxu0 0.0
        %557 = vmatpush1.xpose.msra.mxu0 0.0
        %558 = vmatprep.subr.mxu0 0.0
        %559 = vmatpush1.xpose.msra.mxu0 0.0
        %560 = vmatprep.mubr.f32.mxu0 0.0
        %561 = vmatmul.mubr.f32.gmra.mrb[0].mxu0 %v492
        %v562 = vpop.f32.mrb[0].mxu0
        %v563 = vadd.f32 0.0, %v562
        %v564 = vpop.f32.mrb[0].mxu0
        %565 = vdwg.mxu0
        %v566 = vsel %vm399, %v563, -inf
        %567 = vmax.xlane.f32.xlu0 %v566
        %v568 = vpop.xlane.xlu0 %567
        %v569 = vsub.f32 %v563, %v568
        %v570 = vmul.f32 %v569, 1.442695
        %v571 = vpow.pop %v570
        %v572 = vsel %vm399, %v571, 0.0
        %573 = vadd.xlane.f32.xlu0 %v572
        %v574 = vpop.xlane.xlu0 %573
        %v575 = vrcp.pop %v574
        %v576 = vmul.f32 %v571, %v575
        %577 = vrot.lane.b32.xlu0 %v318, 60
        %v578 = vpop.permute.xlu0 %577
        %v581 = vsel %vm399, %v576, 0
        %583 = vmatprep.subr.mxu0 0.0
        %584 = vmatpush1.msra.mxu0 %v578
        %585 = vmatprep.subr.mxu0 0.0
        %586 = vmatpush1.msra.mxu0 0.0
        %587 = vmatprep.subr.mxu0 0.0
        %588 = vmatpush1.msra.mxu0 0.0
        %589 = vmatprep.subr.mxu0 0.0
        %590 = vmatpush1.msra.mxu0 0.0
        %591 = vmatprep.subr.mxu0 0.0
        %592 = vmatpush1.msra.mxu0 0.0
        %593 = vmatprep.subr.mxu0 0.0
        %594 = vmatpush1.msra.mxu0 0.0
        %595 = vmatprep.subr.mxu0 0.0
        %596 = vmatpush1.msra.mxu0 0.0
        %597 = vmatprep.subr.mxu0 0.0
        %598 = vmatpush1.msra.mxu0 0.0
        %599 = vmatprep.subr.mxu0 0.0
        %600 = vmatpush1.msra.mxu0 0.0
        %601 = vmatprep.subr.mxu0 0.0
        %602 = vmatpush1.msra.mxu0 0.0
        %603 = vmatprep.subr.mxu0 0.0
        %604 = vmatpush1.msra.mxu0 0.0
        %605 = vmatprep.subr.mxu0 0.0
        %606 = vmatpush1.msra.mxu0 0.0
        %607 = vmatprep.subr.mxu0 0.0
        %608 = vmatpush1.msra.mxu0 0.0
        %609 = vmatprep.subr.mxu0 0.0
        %610 = vmatpush1.msra.mxu0 0.0
        %611 = vmatprep.subr.mxu0 0.0
        %612 = vmatpush1.msra.mxu0 0.0
        %613 = vmatprep.subr.mxu0 0.0
        %614 = vmatpush1.msra.mxu0 0.0
        %615 = vmatprep.subr.mxu0 0.0
        %616 = vmatpush1.msra.mxu0 0.0
        %617 = vmatprep.subr.mxu0 0.0
        %618 = vmatpush1.msra.mxu0 0.0
        %619 = vmatprep.subr.mxu0 0.0
        %620 = vmatpush1.msra.mxu0 0.0
        %621 = vmatprep.subr.mxu0 0.0
        %622 = vmatpush1.msra.mxu0 0.0
        %623 = vmatprep.subr.mxu0 0.0
        %624 = vmatpush1.msra.mxu0 0.0
        %625 = vmatprep.subr.mxu0 0.0
        %626 = vmatpush1.msra.mxu0 0.0
        %627 = vmatprep.subr.mxu0 0.0
        %628 = vmatpush1.msra.mxu0 0.0
        %629 = vmatprep.subr.mxu0 0.0
        %630 = vmatpush1.msra.mxu0 0.0
        %631 = vmatprep.subr.mxu0 0.0
        %632 = vmatpush1.msra.mxu0 0.0
        %633 = vmatprep.subr.mxu0 0.0
        %634 = vmatpush1.msra.mxu0 0.0
        %635 = vmatprep.subr.mxu0 0.0
        %636 = vmatpush1.msra.mxu0 0.0
        %637 = vmatprep.subr.mxu0 0.0
        %638 = vmatpush1.msra.mxu0 0.0
        %639 = vmatprep.subr.mxu0 0.0
        %640 = vmatpush1.msra.mxu0 0.0
        %641 = vmatprep.subr.mxu0 0.0
        %642 = vmatpush1.msra.mxu0 0.0
        %643 = vmatprep.subr.mxu0 0.0
        %644 = vmatpush1.msra.mxu0 0.0
        %645 = vmatprep.subr.mxu0 0.0
        %646 = vmatpush1.msra.mxu0 0.0
        %647 = vmatprep.mubr.f32.mxu0 0.0
        %648 = vmatmul.mubr.f32.gmra.mrb[0].mxu0 %v581
        %v649 = vpop.f32.mrb[0].mxu0
        %v650 = vadd.f32 0.0, %v649
        %v651 = vpop.f32.mrb[0].mxu0
        %652 = vdwg.mxu0
        %s653 = scalar_lea.vmem [#allocation7], 4
        %v654 = vld [vmem:[%s653] sm:$0xf]
        %v656 = vsel %vm324, %v650, 0
        %vm658 = vcmask 1043456
        %v660 = vsel %vm658, %v654, 0
        %662 = vmatprep.subr.mxu0 0.0
        %663 = vmatpush1.msra.mxu0 %v660
        %664 = vmatprep.subr.mxu0 0.0
        %665 = vmatpush1.msra.mxu0 0.0
        %666 = vmatprep.subr.mxu0 0.0
        %667 = vmatpush1.msra.mxu0 0.0
        %668 = vmatprep.subr.mxu0 0.0
        %669 = vmatpush1.msra.mxu0 0.0
        %670 = vmatprep.subr.mxu0 0.0
        %671 = vmatpush1.msra.mxu0 0.0
        %672 = vmatprep.subr.mxu0 0.0
        %673 = vmatpush1.msra.mxu0 0.0
        %674 = vmatprep.subr.mxu0 0.0
        %675 = vmatpush1.msra.mxu0 0.0
        %676 = vmatprep.subr.mxu0 0.0
        %677 = vmatpush1.msra.mxu0 0.0
        %678 = vmatprep.subr.mxu0 0.0
        %679 = vmatpush1.msra.mxu0 0.0
        %680 = vmatprep.subr.mxu0 0.0
        %681 = vmatpush1.msra.mxu0 0.0
        %682 = vmatprep.subr.mxu0 0.0
        %683 = vmatpush1.msra.mxu0 0.0
        %684 = vmatprep.subr.mxu0 0.0
        %685 = vmatpush1.msra.mxu0 0.0
        %686 = vmatprep.subr.mxu0 0.0
        %687 = vmatpush1.msra.mxu0 0.0
        %688 = vmatprep.subr.mxu0 0.0
        %689 = vmatpush1.msra.mxu0 0.0
        %690 = vmatprep.subr.mxu0 0.0
        %691 = vmatpush1.msra.mxu0 0.0
        %692 = vmatprep.subr.mxu0 0.0
        %693 = vmatpush1.msra.mxu0 0.0
        %694 = vmatprep.subr.mxu0 0.0
        %695 = vmatpush1.msra.mxu0 0.0
        %696 = vmatprep.subr.mxu0 0.0
        %697 = vmatpush1.msra.mxu0 0.0
        %698 = vmatprep.subr.mxu0 0.0
        %699 = vmatpush1.msra.mxu0 0.0
        %700 = vmatprep.subr.mxu0 0.0
        %701 = vmatpush1.msra.mxu0 0.0
        %702 = vmatprep.subr.mxu0 0.0
        %703 = vmatpush1.msra.mxu0 0.0
        %704 = vmatprep.subr.mxu0 0.0
        %705 = vmatpush1.msra.mxu0 0.0
        %706 = vmatprep.subr.mxu0 0.0
        %707 = vmatpush1.msra.mxu0 0.0
        %708 = vmatprep.subr.mxu0 0.0
        %709 = vmatpush1.msra.mxu0 0.0
        %710 = vmatprep.subr.mxu0 0.0
        %711 = vmatpush1.msra.mxu0 0.0
        %712 = vmatprep.subr.mxu0 0.0
        %713 = vmatpush1.msra.mxu0 0.0
        %714 = vmatprep.subr.mxu0 0.0
        %715 = vmatpush1.msra.mxu0 0.0
        %716 = vmatprep.subr.mxu0 0.0
        %717 = vmatpush1.msra.mxu0 0.0
        %718 = vmatprep.subr.mxu0 0.0
        %719 = vmatpush1.msra.mxu0 0.0
        %720 = vmatprep.subr.mxu0 0.0
        %721 = vmatpush1.msra.mxu0 0.0
        %722 = vmatprep.subr.mxu0 0.0
        %723 = vmatpush1.msra.mxu0 0.0
        %724 = vmatprep.subr.mxu0 0.0
        %725 = vmatpush1.msra.mxu0 0.0
        %726 = vmatprep.mubr.f32.mxu0 0.0
        %727 = vmatmul.mubr.f32.gmra.mrb[0].mxu0 %v656
        %v728 = vpop.f32.mrb[0].mxu0
        %v729 = vadd.f32 0.0, %v728
        %v730 = vpop.f32.mrb[0].mxu0
        %731 = vdwg.mxu0
        %v733 = vsel %vm324, %v484, 0
        %v736 = vsel %vm658, %v487, 0
        %738 = vmatprep.subr.mxu0 0.0
        %739 = vmatpush1.msra.mxu0 %v736
        %740 = vmatprep.subr.mxu0 0.0
        %741 = vmatpush1.msra.mxu0 0.0
        %742 = vmatprep.subr.mxu0 0.0
        %743 = vmatpush1.msra.mxu0 0.0
        %744 = vmatprep.subr.mxu0 0.0
        %745 = vmatpush1.msra.mxu0 0.0
        %746 = vmatprep.subr.mxu0 0.0
        %747 = vmatpush1.msra.mxu0 0.0
        %748 = vmatprep.subr.mxu0 0.0
        %749 = vmatpush1.msra.mxu0 0.0
        %750 = vmatprep.subr.mxu0 0.0
        %751 = vmatpush1.msra.mxu0 0.0
        %752 = vmatprep.subr.mxu0 0.0
        %753 = vmatpush1.msra.mxu0 0.0
        %754 = vmatprep.subr.mxu0 0.0
        %755 = vmatpush1.msra.mxu0 0.0
        %756 = vmatprep.subr.mxu0 0.0
        %757 = vmatpush1.msra.mxu0 0.0
        %758 = vmatprep.subr.mxu0 0.0
        %759 = vmatpush1.msra.mxu0 0.0
        %760 = vmatprep.subr.mxu0 0.0
        %761 = vmatpush1.msra.mxu0 0.0
        %762 = vmatprep.subr.mxu0 0.0
        %763 = vmatpush1.msra.mxu0 0.0
        %764 = vmatprep.subr.mxu0 0.0
        %765 = vmatpush1.msra.mxu0 0.0
        %766 = vmatprep.subr.mxu0 0.0
        %767 = vmatpush1.msra.mxu0 0.0
        %768 = vmatprep.subr.mxu0 0.0
        %769 = vmatpush1.msra.mxu0 0.0
        %770 = vmatprep.subr.mxu0 0.0
        %771 = vmatpush1.msra.mxu0 0.0
        %772 = vmatprep.subr.mxu0 0.0
        %773 = vmatpush1.msra.mxu0 0.0
        %774 = vmatprep.subr.mxu0 0.0
        %775 = vmatpush1.msra.mxu0 0.0
        %776 = vmatprep.subr.mxu0 0.0
        %777 = vmatpush1.msra.mxu0 0.0
        %778 = vmatprep.subr.mxu0 0.0
        %779 = vmatpush1.msra.mxu0 0.0
        %780 = vmatprep.subr.mxu0 0.0
        %781 = vmatpush1.msra.mxu0 0.0
        %782 = vmatprep.subr.mxu0 0.0
        %783 = vmatpush1.msra.mxu0 0.0
        %784 = vmatprep.subr.mxu0 0.0
        %785 = vmatpush1.msra.mxu0 0.0
        %786 = vmatprep.subr.mxu0 0.0
        %787 = vmatpush1.msra.mxu0 0.0
        %788 = vmatprep.subr.mxu0 0.0
        %789 = vmatpush1.msra.mxu0 0.0
        %790 = vmatprep.subr.mxu0 0.0
        %791 = vmatpush1.msra.mxu0 0.0
        %792 = vmatprep.subr.mxu0 0.0
        %793 = vmatpush1.msra.mxu0 0.0
        %794 = vmatprep.subr.mxu0 0.0
        %795 = vmatpush1.msra.mxu0 0.0
        %796 = vmatprep.subr.mxu0 0.0
        %797 = vmatpush1.msra.mxu0 0.0
        %798 = vmatprep.subr.mxu0 0.0
        %799 = vmatpush1.msra.mxu0 0.0
        %800 = vmatprep.subr.mxu0 0.0
        %801 = vmatpush1.msra.mxu0 0.0
        %802 = vmatprep.mubr.f32.mxu0 0.0
        %803 = vmatmul.mubr.f32.gmra.mrb[0].mxu0 %v733
        %v804 = vpop.f32.mrb[0].mxu0
        %v805 = vadd.f32 %v729, %v804
        %v806 = vpop.f32.mrb[0].mxu0
        %807 = vdwg.mxu0
        %808 = vrot.lane.b32.xlu0 %v318, 120
        %v809 = vpop.permute.xlu0 %808
        %810 = vrot.lane.b32.xlu0 %v318, 88
        %v811 = vpop.permute.xlu0 %810
        %v812 = vsel %vm324, %v809, 0
        %v814 = vsel %vm324, %v811, 0
        %816 = vmatprep.subr.mxu0 0.0
        %817 = vmatpush1.xpose.msra.mxu0 %v814
        %818 = vmatprep.subr.mxu0 0.0
        %819 = vmatpush1.xpose.msra.mxu0 0.0
        %820 = vmatprep.subr.mxu0 0.0
        %821 = vmatpush1.xpose.msra.mxu0 0.0
        %822 = vmatprep.subr.mxu0 0.0
        %823 = vmatpush1.xpose.msra.mxu0 0.0
        %824 = vmatprep.subr.mxu0 0.0
        %825 = vmatpush1.xpose.msra.mxu0 0.0
        %826 = vmatprep.subr.mxu0 0.0
        %827 = vmatpush1.xpose.msra.mxu0 0.0
        %828 = vmatprep.subr.mxu0 0.0
        %829 = vmatpush1.xpose.msra.mxu0 0.0
        %830 = vmatprep.subr.mxu0 0.0
        %831 = vmatpush1.xpose.msra.mxu0 0.0
        %832 = vmatprep.subr.mxu0 0.0
        %833 = vmatpush1.xpose.msra.mxu0 0.0
        %834 = vmatprep.subr.mxu0 0.0
        %835 = vmatpush1.xpose.msra.mxu0 0.0
        %836 = vmatprep.subr.mxu0 0.0
        %837 = vmatpush1.xpose.msra.mxu0 0.0
        %838 = vmatprep.subr.mxu0 0.0
        %839 = vmatpush1.xpose.msra.mxu0 0.0
        %840 = vmatprep.subr.mxu0 0.0
        %841 = vmatpush1.xpose.msra.mxu0 0.0
        %842 = vmatprep.subr.mxu0 0.0
        %843 = vmatpush1.xpose.msra.mxu0 0.0
        %844 = vmatprep.subr.mxu0 0.0
        %845 = vmatpush1.xpose.msra.mxu0 0.0
        %846 = vmatprep.subr.mxu0 0.0
        %847 = vmatpush1.xpose.msra.mxu0 0.0
        %848 = vmatprep.subr.mxu0 0.0
        %849 = vmatpush1.xpose.msra.mxu0 0.0
        %850 = vmatprep.subr.mxu0 0.0
        %851 = vmatpush1.xpose.msra.mxu0 0.0
        %852 = vmatprep.subr.mxu0 0.0
        %853 = vmatpush1.xpose.msra.mxu0 0.0
        %854 = vmatprep.subr.mxu0 0.0
        %855 = vmatpush1.xpose.msra.mxu0 0.0
        %856 = vmatprep.subr.mxu0 0.0
        %857 = vmatpush1.xpose.msra.mxu0 0.0
        %858 = vmatprep.subr.mxu0 0.0
        %859 = vmatpush1.xpose.msra.mxu0 0.0
        %860 = vmatprep.subr.mxu0 0.0
        %861 = vmatpush1.xpose.msra.mxu0 0.0
        %862 = vmatprep.subr.mxu0 0.0
        %863 = vmatpush1.xpose.msra.mxu0 0.0
        %864 = vmatprep.subr.mxu0 0.0
        %865 = vmatpush1.xpose.msra.mxu0 0.0
        %866 = vmatprep.subr.mxu0 0.0
        %867 = vmatpush1.xpose.msra.mxu0 0.0
        %868 = vmatprep.subr.mxu0 0.0
        %869 = vmatpush1.xpose.msra.mxu0 0.0
        %870 = vmatprep.subr.mxu0 0.0
        %871 = vmatpush1.xpose.msra.mxu0 0.0
        %872 = vmatprep.subr.mxu0 0.0
        %873 = vmatpush1.xpose.msra.mxu0 0.0
        %874 = vmatprep.subr.mxu0 0.0
        %875 = vmatpush1.xpose.msra.mxu0 0.0
        %876 = vmatprep.subr.mxu0 0.0
        %877 = vmatpush1.xpose.msra.mxu0 0.0
        %878 = vmatprep.subr.mxu0 0.0
        %879 = vmatpush1.xpose.msra.mxu0 0.0
        %880 = vmatprep.mubr.f32.mxu0 0.0
        %881 = vmatmul.mubr.f32.gmra.mrb[0].mxu0 %v812
        %v882 = vpop.f32.mrb[0].mxu0
        %v883 = vadd.f32 0.0, %v882
        %v884 = vpop.f32.mrb[0].mxu0
        %885 = vdwg.mxu0
        %v886 = vsel %vm399, %v883, -inf
        %887 = vmax.xlane.f32.xlu0 %v886
        %v888 = vpop.xlane.xlu0 %887
        %v889 = vsub.f32 %v883, %v888
        %v890 = vmul.f32 %v889, 1.442695
        %v891 = vpow.pop %v890
        %v892 = vsel %vm399, %v891, 0.0
        %893 = vadd.xlane.f32.xlu0 %v892
        %v894 = vpop.xlane.xlu0 %893
        %v895 = vrcp.pop %v894
        %v896 = vmul.f32 %v891, %v895
        %897 = vrot.lane.b32.xlu0 %v318, 56
        %v898 = vpop.permute.xlu0 %897
        %v901 = vsel %vm399, %v896, 0
        %903 = vmatprep.subr.mxu0 0.0
        %904 = vmatpush1.msra.mxu0 %v898
        %905 = vmatprep.subr.mxu0 0.0
        %906 = vmatpush1.msra.mxu0 0.0
        %907 = vmatprep.subr.mxu0 0.0
        %908 = vmatpush1.msra.mxu0 0.0
        %909 = vmatprep.subr.mxu0 0.0
        %910 = vmatpush1.msra.mxu0 0.0
        %911 = vmatprep.subr.mxu0 0.0
        %912 = vmatpush1.msra.mxu0 0.0
        %913 = vmatprep.subr.mxu0 0.0
        %914 = vmatpush1.msra.mxu0 0.0
        %915 = vmatprep.subr.mxu0 0.0
        %916 = vmatpush1.msra.mxu0 0.0
        %917 = vmatprep.subr.mxu0 0.0
        %918 = vmatpush1.msra.mxu0 0.0
        %919 = vmatprep.subr.mxu0 0.0
        %920 = vmatpush1.msra.mxu0 0.0
        %921 = vmatprep.subr.mxu0 0.0
        %922 = vmatpush1.msra.mxu0 0.0
        %923 = vmatprep.subr.mxu0 0.0
        %924 = vmatpush1.msra.mxu0 0.0
        %925 = vmatprep.subr.mxu0 0.0
        %926 = vmatpush1.msra.mxu0 0.0
        %927 = vmatprep.subr.mxu0 0.0
        %928 = vmatpush1.msra.mxu0 0.0
        %929 = vmatprep.subr.mxu0 0.0
        %930 = vmatpush1.msra.mxu0 0.0
        %931 = vmatprep.subr.mxu0 0.0
        %932 = vmatpush1.msra.mxu0 0.0
        %933 = vmatprep.subr.mxu0 0.0
        %934 = vmatpush1.msra.mxu0 0.0
        %935 = vmatprep.subr.mxu0 0.0
        %936 = vmatpush1.msra.mxu0 0.0
        %937 = vmatprep.subr.mxu0 0.0
        %938 = vmatpush1.msra.mxu0 0.0
        %939 = vmatprep.subr.mxu0 0.0
        %940 = vmatpush1.msra.mxu0 0.0
        %941 = vmatprep.subr.mxu0 0.0
        %942 = vmatpush1.msra.mxu0 0.0
        %943 = vmatprep.subr.mxu0 0.0
        %944 = vmatpush1.msra.mxu0 0.0
        %945 = vmatprep.subr.mxu0 0.0
        %946 = vmatpush1.msra.mxu0 0.0
        %947 = vmatprep.subr.mxu0 0.0
        %948 = vmatpush1.msra.mxu0 0.0
        %949 = vmatprep.subr.mxu0 0.0
        %950 = vmatpush1.msra.mxu0 0.0
        %951 = vmatprep.subr.mxu0 0.0
        %952 = vmatpush1.msra.mxu0 0.0
        %953 = vmatprep.subr.mxu0 0.0
        %954 = vmatpush1.msra.mxu0 0.0
        %955 = vmatprep.subr.mxu0 0.0
        %956 = vmatpush1.msra.mxu0 0.0
        %957 = vmatprep.subr.mxu0 0.0
        %958 = vmatpush1.msra.mxu0 0.0
        %959 = vmatprep.subr.mxu0 0.0
        %960 = vmatpush1.msra.mxu0 0.0
        %961 = vmatprep.subr.mxu0 0.0
        %962 = vmatpush1.msra.mxu0 0.0
        %963 = vmatprep.subr.mxu0 0.0
        %964 = vmatpush1.msra.mxu0 0.0
        %965 = vmatprep.subr.mxu0 0.0
        %966 = vmatpush1.msra.mxu0 0.0
        %967 = vmatprep.mubr.f32.mxu0 0.0
        %968 = vmatmul.mubr.f32.gmra.mrb[0].mxu0 %v901
        %v969 = vpop.f32.mrb[0].mxu0
        %v970 = vadd.f32 0.0, %v969
        %v971 = vpop.f32.mrb[0].mxu0
        %972 = vdwg.mxu0
        %s973 = scalar_lea.vmem [#allocation7], 8
        %v974 = vld [vmem:[%s973] sm:$0xf]
        %v976 = vsel %vm324, %v970, 0
        %v979 = vsel %vm658, %v974, 0
        %981 = vmatprep.subr.mxu0 0.0
        %982 = vmatpush1.msra.mxu0 %v979
        %983 = vmatprep.subr.mxu0 0.0
        %984 = vmatpush1.msra.mxu0 0.0
        %985 = vmatprep.subr.mxu0 0.0
        %986 = vmatpush1.msra.mxu0 0.0
        %987 = vmatprep.subr.mxu0 0.0
        %988 = vmatpush1.msra.mxu0 0.0
        %989 = vmatprep.subr.mxu0 0.0
        %990 = vmatpush1.msra.mxu0 0.0
        %991 = vmatprep.subr.mxu0 0.0
        %992 = vmatpush1.msra.mxu0 0.0
        %993 = vmatprep.subr.mxu0 0.0
        %994 = vmatpush1.msra.mxu0 0.0
        %995 = vmatprep.subr.mxu0 0.0
        %996 = vmatpush1.msra.mxu0 0.0
        %997 = vmatprep.subr.mxu0 0.0
        %998 = vmatpush1.msra.mxu0 0.0
        %999 = vmatprep.subr.mxu0 0.0
        %1000 = vmatpush1.msra.mxu0 0.0
        %1001 = vmatprep.subr.mxu0 0.0
        %1002 = vmatpush1.msra.mxu0 0.0
        %1003 = vmatprep.subr.mxu0 0.0
        %1004 = vmatpush1.msra.mxu0 0.0
        %1005 = vmatprep.subr.mxu0 0.0
        %1006 = vmatpush1.msra.mxu0 0.0
        %1007 = vmatprep.subr.mxu0 0.0
        %1008 = vmatpush1.msra.mxu0 0.0
        %1009 = vmatprep.subr.mxu0 0.0
        %1010 = vmatpush1.msra.mxu0 0.0
        %1011 = vmatprep.subr.mxu0 0.0
        %1012 = vmatpush1.msra.mxu0 0.0
        %1013 = vmatprep.subr.mxu0 0.0
        %1014 = vmatpush1.msra.mxu0 0.0
        %1015 = vmatprep.subr.mxu0 0.0
        %1016 = vmatpush1.msra.mxu0 0.0
        %1017 = vmatprep.subr.mxu0 0.0
        %1018 = vmatpush1.msra.mxu0 0.0
        %1019 = vmatprep.subr.mxu0 0.0
        %1020 = vmatpush1.msra.mxu0 0.0
        %1021 = vmatprep.subr.mxu0 0.0
        %1022 = vmatpush1.msra.mxu0 0.0
        %1023 = vmatprep.subr.mxu0 0.0
        %1024 = vmatpush1.msra.mxu0 0.0
        %1025 = vmatprep.subr.mxu0 0.0
        %1026 = vmatpush1.msra.mxu0 0.0
        %1027 = vmatprep.subr.mxu0 0.0
        %1028 = vmatpush1.msra.mxu0 0.0
        %1029 = vmatprep.subr.mxu0 0.0
        %1030 = vmatpush1.msra.mxu0 0.0
        %1031 = vmatprep.subr.mxu0 0.0
        %1032 = vmatpush1.msra.mxu0 0.0
        %1033 = vmatprep.subr.mxu0 0.0
        %1034 = vmatpush1.msra.mxu0 0.0
        %1035 = vmatprep.subr.mxu0 0.0
        %1036 = vmatpush1.msra.mxu0 0.0
        %1037 = vmatprep.subr.mxu0 0.0
        %1038 = vmatpush1.msra.mxu0 0.0
        %1039 = vmatprep.subr.mxu0 0.0
        %1040 = vmatpush1.msra.mxu0 0.0
        %1041 = vmatprep.subr.mxu0 0.0
        %1042 = vmatpush1.msra.mxu0 0.0
        %1043 = vmatprep.subr.mxu0 0.0
        %1044 = vmatpush1.msra.mxu0 0.0
        %1045 = vmatprep.mubr.f32.mxu0 0.0
        %1046 = vmatmul.mubr.f32.gmra.mrb[0].mxu0 %v976
        %v1047 = vpop.f32.mrb[0].mxu0
        %v1048 = vadd.f32 0.0, %v1047
        %v1049 = vpop.f32.mrb[0].mxu0
        %1050 = vdwg.mxu0
        %v1051 = vadd.f32 %v805, %v1048
        %1052 = vrot.lane.b32.xlu0 %v318, 116
        %v1053 = vpop.permute.xlu0 %1052
        %1054 = vrot.lane.b32.xlu0 %v318, 84
        %v1055 = vpop.permute.xlu0 %1054
        %v1056 = vsel %vm324, %v1053, 0
        %v1058 = vsel %vm324, %v1055, 0
        %1060 = vmatprep.subr.mxu0 0.0
        %1061 = vmatpush1.xpose.msra.mxu0 %v1058
        %1062 = vmatprep.subr.mxu0 0.0
        %1063 = vmatpush1.xpose.msra.mxu0 0.0
        %1064 = vmatprep.subr.mxu0 0.0
        %1065 = vmatpush1.xpose.msra.mxu0 0.0
        %1066 = vmatprep.subr.mxu0 0.0
        %1067 = vmatpush1.xpose.msra.mxu0 0.0
        %1068 = vmatprep.subr.mxu0 0.0
        %1069 = vmatpush1.xpose.msra.mxu0 0.0
        %1070 = vmatprep.subr.mxu0 0.0
        %1071 = vmatpush1.xpose.msra.mxu0 0.0
        %1072 = vmatprep.subr.mxu0 0.0
        %1073 = vmatpush1.xpose.msra.mxu0 0.0
        %1074 = vmatprep.subr.mxu0 0.0
        %1075 = vmatpush1.xpose.msra.mxu0 0.0
        %1076 = vmatprep.subr.mxu0 0.0
        %1077 = vmatpush1.xpose.msra.mxu0 0.0
        %1078 = vmatprep.subr.mxu0 0.0
        %1079 = vmatpush1.xpose.msra.mxu0 0.0
        %1080 = vmatprep.subr.mxu0 0.0
        %1081 = vmatpush1.xpose.msra.mxu0 0.0
        %1082 = vmatprep.subr.mxu0 0.0
        %1083 = vmatpush1.xpose.msra.mxu0 0.0
        %1084 = vmatprep.subr.mxu0 0.0
        %1085 = vmatpush1.xpose.msra.mxu0 0.0
        %1086 = vmatprep.subr.mxu0 0.0
        %1087 = vmatpush1.xpose.msra.mxu0 0.0
        %1088 = vmatprep.subr.mxu0 0.0
        %1089 = vmatpush1.xpose.msra.mxu0 0.0
        %1090 = vmatprep.subr.mxu0 0.0
        %1091 = vmatpush1.xpose.msra.mxu0 0.0
        %1092 = vmatprep.subr.mxu0 0.0
        %1093 = vmatpush1.xpose.msra.mxu0 0.0
        %1094 = vmatprep.subr.mxu0 0.0
        %1095 = vmatpush1.xpose.msra.mxu0 0.0
        %1096 = vmatprep.subr.mxu0 0.0
        %1097 = vmatpush1.xpose.msra.mxu0 0.0
        %1098 = vmatprep.subr.mxu0 0.0
        %1099 = vmatpush1.xpose.msra.mxu0 0.0
        %1100 = vmatprep.subr.mxu0 0.0
        %1101 = vmatpush1.xpose.msra.mxu0 0.0
        %1102 = vmatprep.subr.mxu0 0.0
        %1103 = vmatpush1.xpose.msra.mxu0 0.0
        %1104 = vmatprep.subr.mxu0 0.0
        %1105 = vmatpush1.xpose.msra.mxu0 0.0
        %1106 = vmatprep.subr.mxu0 0.0
        %1107 = vmatpush1.xpose.msra.mxu0 0.0
        %1108 = vmatprep.subr.mxu0 0.0
        %1109 = vmatpush1.xpose.msra.mxu0 0.0
        %1110 = vmatprep.subr.mxu0 0.0
        %1111 = vmatpush1.xpose.msra.mxu0 0.0
        %1112 = vmatprep.subr.mxu0 0.0
        %1113 = vmatpush1.xpose.msra.mxu0 0.0
        %1114 = vmatprep.subr.mxu0 0.0
        %1115 = vmatpush1.xpose.msra.mxu0 0.0
        %1116 = vmatprep.subr.mxu0 0.0
        %1117 = vmatpush1.xpose.msra.mxu0 0.0
        %1118 = vmatprep.subr.mxu0 0.0
        %1119 = vmatpush1.xpose.msra.mxu0 0.0
        %1120 = vmatprep.subr.mxu0 0.0
        %1121 = vmatpush1.xpose.msra.mxu0 0.0
        %1122 = vmatprep.subr.mxu0 0.0
        %1123 = vmatpush1.xpose.msra.mxu0 0.0
        %1124 = vmatprep.mubr.f32.mxu0 0.0
        %1125 = vmatmul.mubr.f32.gmra.mrb[0].mxu0 %v1056
        %v1126 = vpop.f32.mrb[0].mxu0
        %v1127 = vadd.f32 0.0, %v1126
        %v1128 = vpop.f32.mrb[0].mxu0
        %1129 = vdwg.mxu0
        %v1130 = vsel %vm399, %v1127, -inf
        %1131 = vmax.xlane.f32.xlu0 %v1130
        %v1132 = vpop.xlane.xlu0 %1131
        %v1133 = vsub.f32 %v1127, %v1132
        %v1134 = vmul.f32 %v1133, 1.442695
        %v1135 = vpow.pop %v1134
        %v1136 = vsel %vm399, %v1135, 0.0
        %1137 = vadd.xlane.f32.xlu0 %v1136
        %v1138 = vpop.xlane.xlu0 %1137
        %v1139 = vrcp.pop %v1138
        %v1140 = vmul.f32 %v1135, %v1139
        %1141 = vrot.lane.b32.xlu0 %v318, 52
        %v1142 = vpop.permute.xlu0 %1141
        %v1145 = vsel %vm399, %v1140, 0
        %1147 = vmatprep.subr.mxu0 0.0
        %1148 = vmatpush1.msra.mxu0 %v1142
        %1149 = vmatprep.subr.mxu0 0.0
        %1150 = vmatpush1.msra.mxu0 0.0
        %1151 = vmatprep.subr.mxu0 0.0
        %1152 = vmatpush1.msra.mxu0 0.0
        %1153 = vmatprep.subr.mxu0 0.0
        %1154 = vmatpush1.msra.mxu0 0.0
        %1155 = vmatprep.subr.mxu0 0.0
        %1156 = vmatpush1.msra.mxu0 0.0
        %1157 = vmatprep.subr.mxu0 0.0
        %1158 = vmatpush1.msra.mxu0 0.0
        %1159 = vmatprep.subr.mxu0 0.0
        %1160 = vmatpush1.msra.mxu0 0.0
        %1161 = vmatprep.subr.mxu0 0.0
        %1162 = vmatpush1.msra.mxu0 0.0
        %1163 = vmatprep.subr.mxu0 0.0
        %1164 = vmatpush1.msra.mxu0 0.0
        %1165 = vmatprep.subr.mxu0 0.0
        %1166 = vmatpush1.msra.mxu0 0.0
        %1167 = vmatprep.subr.mxu0 0.0
        %1168 = vmatpush1.msra.mxu0 0.0
        %1169 = vmatprep.subr.mxu0 0.0
        %1170 = vmatpush1.msra.mxu0 0.0
        %1171 = vmatprep.subr.mxu0 0.0
        %1172 = vmatpush1.msra.mxu0 0.0
        %1173 = vmatprep.subr.mxu0 0.0
        %1174 = vmatpush1.msra.mxu0 0.0
        %1175 = vmatprep.subr.mxu0 0.0
        %1176 = vmatpush1.msra.mxu0 0.0
        %1177 = vmatprep.subr.mxu0 0.0
        %1178 = vmatpush1.msra.mxu0 0.0
        %1179 = vmatprep.subr.mxu0 0.0
        %1180 = vmatpush1.msra.mxu0 0.0
        %1181 = vmatprep.subr.mxu0 0.0
        %1182 = vmatpush1.msra.mxu0 0.0
        %1183 = vmatprep.subr.mxu0 0.0
        %1184 = vmatpush1.msra.mxu0 0.0
        %1185 = vmatprep.subr.mxu0 0.0
        %1186 = vmatpush1.msra.mxu0 0.0
        %1187 = vmatprep.subr.mxu0 0.0
        %1188 = vmatpush1.msra.mxu0 0.0
        %1189 = vmatprep.subr.mxu0 0.0
        %1190 = vmatpush1.msra.mxu0 0.0
        %1191 = vmatprep.subr.mxu0 0.0
        %1192 = vmatpush1.msra.mxu0 0.0
        %1193 = vmatprep.subr.mxu0 0.0
        %1194 = vmatpush1.msra.mxu0 0.0
        %1195 = vmatprep.subr.mxu0 0.0
        %1196 = vmatpush1.msra.mxu0 0.0
        %1197 = vmatprep.subr.mxu0 0.0
        %1198 = vmatpush1.msra.mxu0 0.0
        %1199 = vmatprep.subr.mxu0 0.0
        %1200 = vmatpush1.msra.mxu0 0.0
        %1201 = vmatprep.subr.mxu0 0.0
        %1202 = vmatpush1.msra.mxu0 0.0
        %1203 = vmatprep.subr.mxu0 0.0
        %1204 = vmatpush1.msra.mxu0 0.0
        %1205 = vmatprep.subr.mxu0 0.0
        %1206 = vmatpush1.msra.mxu0 0.0
        %1207 = vmatprep.subr.mxu0 0.0
        %1208 = vmatpush1.msra.mxu0 0.0
        %1209 = vmatprep.subr.mxu0 0.0
        %1210 = vmatpush1.msra.mxu0 0.0
        %1211 = vmatprep.mubr.f32.mxu0 0.0
        %1212 = vmatmul.mubr.f32.gmra.mrb[0].mxu0 %v1145
        %v1213 = vpop.f32.mrb[0].mxu0
        %v1214 = vadd.f32 0.0, %v1213
        %v1215 = vpop.f32.mrb[0].mxu0
        %1216 = vdwg.mxu0
        %s1217 = scalar_lea.vmem [#allocation7], 12
        %v1218 = vld [vmem:[%s1217] sm:$0xf]
        %v1220 = vsel %vm324, %v1214, 0
        %v1223 = vsel %vm658, %v1218, 0
        %1225 = vmatprep.subr.mxu0 0.0
        %1226 = vmatpush1.msra.mxu0 %v1223
        %1227 = vmatprep.subr.mxu0 0.0
        %1228 = vmatpush1.msra.mxu0 0.0
        %1229 = vmatprep.subr.mxu0 0.0
        %1230 = vmatpush1.msra.mxu0 0.0
        %1231 = vmatprep.subr.mxu0 0.0
        %1232 = vmatpush1.msra.mxu0 0.0
        %1233 = vmatprep.subr.mxu0 0.0
        %1234 = vmatpush1.msra.mxu0 0.0
        %1235 = vmatprep.subr.mxu0 0.0
        %1236 = vmatpush1.msra.mxu0 0.0
        %1237 = vmatprep.subr.mxu0 0.0
        %1238 = vmatpush1.msra.mxu0 0.0
        %1239 = vmatprep.subr.mxu0 0.0
        %1240 = vmatpush1.msra.mxu0 0.0
        %1241 = vmatprep.subr.mxu0 0.0
        %1242 = vmatpush1.msra.mxu0 0.0
        %1243 = vmatprep.subr.mxu0 0.0
        %1244 = vmatpush1.msra.mxu0 0.0
        %1245 = vmatprep.subr.mxu0 0.0
        %1246 = vmatpush1.msra.mxu0 0.0
        %1247 = vmatprep.subr.mxu0 0.0
        %1248 = vmatpush1.msra.mxu0 0.0
        %1249 = vmatprep.subr.mxu0 0.0
        %1250 = vmatpush1.msra.mxu0 0.0
        %1251 = vmatprep.subr.mxu0 0.0
        %1252 = vmatpush1.msra.mxu0 0.0
        %1253 = vmatprep.subr.mxu0 0.0
        %1254 = vmatpush1.msra.mxu0 0.0
        %1255 = vmatprep.subr.mxu0 0.0
        %1256 = vmatpush1.msra.mxu0 0.0
        %1257 = vmatprep.subr.mxu0 0.0
        %1258 = vmatpush1.msra.mxu0 0.0
        %1259 = vmatprep.subr.mxu0 0.0
        %1260 = vmatpush1.msra.mxu0 0.0
        %1261 = vmatprep.subr.mxu0 0.0
        %1262 = vmatpush1.msra.mxu0 0.0
        %1263 = vmatprep.subr.mxu0 0.0
        %1264 = vmatpush1.msra.mxu0 0.0
        %1265 = vmatprep.subr.mxu0 0.0
        %1266 = vmatpush1.msra.mxu0 0.0
        %1267 = vmatprep.subr.mxu0 0.0
        %1268 = vmatpush1.msra.mxu0 0.0
        %1269 = vmatprep.subr.mxu0 0.0
        %1270 = vmatpush1.msra.mxu0 0.0
        %1271 = vmatprep.subr.mxu0 0.0
        %1272 = vmatpush1.msra.mxu0 0.0
        %1273 = vmatprep.subr.mxu0 0.0
        %1274 = vmatpush1.msra.mxu0 0.0
        %1275 = vmatprep.subr.mxu0 0.0
        %1276 = vmatpush1.msra.mxu0 0.0
        %1277 = vmatprep.subr.mxu0 0.0
        %1278 = vmatpush1.msra.mxu0 0.0
        %1279 = vmatprep.subr.mxu0 0.0
        %1280 = vmatpush1.msra.mxu0 0.0
        %1281 = vmatprep.subr.mxu0 0.0
        %1282 = vmatpush1.msra.mxu0 0.0
        %1283 = vmatprep.subr.mxu0 0.0
        %1284 = vmatpush1.msra.mxu0 0.0
        %1285 = vmatprep.subr.mxu0 0.0
        %1286 = vmatpush1.msra.mxu0 0.0
        %1287 = vmatprep.subr.mxu0 0.0
        %1288 = vmatpush1.msra.mxu0 0.0
        %1289 = vmatprep.mubr.f32.mxu0 0.0
        %1290 = vmatmul.mubr.f32.gmra.mrb[0].mxu0 %v1220
        %v1291 = vpop.f32.mrb[0].mxu0
        %v1292 = vadd.f32 0.0, %v1291
        %v1293 = vpop.f32.mrb[0].mxu0
        %1294 = vdwg.mxu0
        %v1295 = vadd.f32 %v1051, %v1292
        %1296 = vrot.lane.b32.xlu0 %v318, 112
        %v1297 = vpop.permute.xlu0 %1296
        %1298 = vrot.lane.b32.xlu0 %v318, 80
        %v1299 = vpop.permute.xlu0 %1298
        %v1300 = vsel %vm324, %v1297, 0
        %v1302 = vsel %vm324, %v1299, 0
        %1304 = vmatprep.subr.mxu0 0.0
        %1305 = vmatpush1.xpose.msra.mxu0 %v1302
        %1306 = vmatprep.subr.mxu0 0.0
        %1307 = vmatpush1.xpose.msra.mxu0 0.0
        %1308 = vmatprep.subr.mxu0 0.0
        %1309 = vmatpush1.xpose.msra.mxu0 0.0
        %1310 = vmatprep.subr.mxu0 0.0
        %1311 = vmatpush1.xpose.msra.mxu0 0.0
        %1312 = vmatprep.subr.mxu0 0.0
        %1313 = vmatpush1.xpose.msra.mxu0 0.0
        %1314 = vmatprep.subr.mxu0 0.0
        %1315 = vmatpush1.xpose.msra.mxu0 0.0
        %1316 = vmatprep.subr.mxu0 0.0
        %1317 = vmatpush1.xpose.msra.mxu0 0.0
        %1318 = vmatprep.subr.mxu0 0.0
        %1319 = vmatpush1.xpose.msra.mxu0 0.0
        %1320 = vmatprep.subr.mxu0 0.0
        %1321 = vmatpush1.xpose.msra.mxu0 0.0
        %1322 = vmatprep.subr.mxu0 0.0
        %1323 = vmatpush1.xpose.msra.mxu0 0.0
        %1324 = vmatprep.subr.mxu0 0.0
        %1325 = vmatpush1.xpose.msra.mxu0 0.0
        %1326 = vmatprep.subr.mxu0 0.0
        %1327 = vmatpush1.xpose.msra.mxu0 0.0
        %1328 = vmatprep.subr.mxu0 0.0
        %1329 = vmatpush1.xpose.msra.mxu0 0.0
        %1330 = vmatprep.subr.mxu0 0.0
        %1331 = vmatpush1.xpose.msra.mxu0 0.0
        %1332 = vmatprep.subr.mxu0 0.0
        %1333 = vmatpush1.xpose.msra.mxu0 0.0
        %1334 = vmatprep.subr.mxu0 0.0
        %1335 = vmatpush1.xpose.msra.mxu0 0.0
        %1336 = vmatprep.subr.mxu0 0.0
        %1337 = vmatpush1.xpose.msra.mxu0 0.0
        %1338 = vmatprep.subr.mxu0 0.0
        %1339 = vmatpush1.xpose.msra.mxu0 0.0
        %1340 = vmatprep.subr.mxu0 0.0
        %1341 = vmatpush1.xpose.msra.mxu0 0.0
        %1342 = vmatprep.subr.mxu0 0.0
        %1343 = vmatpush1.xpose.msra.mxu0 0.0
        %1344 = vmatprep.subr.mxu0 0.0
        %1345 = vmatpush1.xpose.msra.mxu0 0.0
        %1346 = vmatprep.subr.mxu0 0.0
        %1347 = vmatpush1.xpose.msra.mxu0 0.0
        %1348 = vmatprep.subr.mxu0 0.0
        %1349 = vmatpush1.xpose.msra.mxu0 0.0
        %1350 = vmatprep.subr.mxu0 0.0
        %1351 = vmatpush1.xpose.msra.mxu0 0.0
        %1352 = vmatprep.subr.mxu0 0.0
        %1353 = vmatpush1.xpose.msra.mxu0 0.0
        %1354 = vmatprep.subr.mxu0 0.0
        %1355 = vmatpush1.xpose.msra.mxu0 0.0
        %1356 = vmatprep.subr.mxu0 0.0
        %1357 = vmatpush1.xpose.msra.mxu0 0.0
        %1358 = vmatprep.subr.mxu0 0.0
        %1359 = vmatpush1.xpose.msra.mxu0 0.0
        %1360 = vmatprep.subr.mxu0 0.0
        %1361 = vmatpush1.xpose.msra.mxu0 0.0
        %1362 = vmatprep.subr.mxu0 0.0
        %1363 = vmatpush1.xpose.msra.mxu0 0.0
        %1364 = vmatprep.subr.mxu0 0.0
        %1365 = vmatpush1.xpose.msra.mxu0 0.0
        %1366 = vmatprep.subr.mxu0 0.0
        %1367 = vmatpush1.xpose.msra.mxu0 0.0
        %1368 = vmatprep.mubr.f32.mxu0 0.0
        %1369 = vmatmul.mubr.f32.gmra.mrb[0].mxu0 %v1300
        %v1370 = vpop.f32.mrb[0].mxu0
        %v1371 = vadd.f32 0.0, %v1370
        %v1372 = vpop.f32.mrb[0].mxu0
        %1373 = vdwg.mxu0
        %v1374 = vsel %vm399, %v1371, -inf
        %1375 = vmax.xlane.f32.xlu0 %v1374
        %v1376 = vpop.xlane.xlu0 %1375
        %v1377 = vsub.f32 %v1371, %v1376
        %v1378 = vmul.f32 %v1377, 1.442695
        %v1379 = vpow.pop %v1378
        %v1380 = vsel %vm399, %v1379, 0.0
        %1381 = vadd.xlane.f32.xlu0 %v1380
        %v1382 = vpop.xlane.xlu0 %1381
        %v1383 = vrcp.pop %v1382
        %v1384 = vmul.f32 %v1379, %v1383
        %1385 = vrot.lane.b32.xlu0 %v318, 48
        %v1386 = vpop.permute.xlu0 %1385
        %v1389 = vsel %vm399, %v1384, 0
        %1391 = vmatprep.subr.mxu0 0.0
        %1392 = vmatpush1.msra.mxu0 %v1386
        %1393 = vmatprep.subr.mxu0 0.0
        %1394 = vmatpush1.msra.mxu0 0.0
        %1395 = vmatprep.subr.mxu0 0.0
        %1396 = vmatpush1.msra.mxu0 0.0
        %1397 = vmatprep.subr.mxu0 0.0
        %1398 = vmatpush1.msra.mxu0 0.0
        %1399 = vmatprep.subr.mxu0 0.0
        %1400 = vmatpush1.msra.mxu0 0.0
        %1401 = vmatprep.subr.mxu0 0.0
        %1402 = vmatpush1.msra.mxu0 0.0
        %1403 = vmatprep.subr.mxu0 0.0
        %1404 = vmatpush1.msra.mxu0 0.0
        %1405 = vmatprep.subr.mxu0 0.0
        %1406 = vmatpush1.msra.mxu0 0.0
        %1407 = vmatprep.subr.mxu0 0.0
        %1408 = vmatpush1.msra.mxu0 0.0
        %1409 = vmatprep.subr.mxu0 0.0
        %1410 = vmatpush1.msra.mxu0 0.0
        %1411 = vmatprep.subr.mxu0 0.0
        %1412 = vmatpush1.msra.mxu0 0.0
        %1413 = vmatprep.subr.mxu0 0.0
        %1414 = vmatpush1.msra.mxu0 0.0
        %1415 = vmatprep.subr.mxu0 0.0
        %1416 = vmatpush1.msra.mxu0 0.0
        %1417 = vmatprep.subr.mxu0 0.0
        %1418 = vmatpush1.msra.mxu0 0.0
        %1419 = vmatprep.subr.mxu0 0.0
        %1420 = vmatpush1.msra.mxu0 0.0
        %1421 = vmatprep.subr.mxu0 0.0
        %1422 = vmatpush1.msra.mxu0 0.0
        %1423 = vmatprep.subr.mxu0 0.0
        %1424 = vmatpush1.msra.mxu0 0.0
        %1425 = vmatprep.subr.mxu0 0.0
        %1426 = vmatpush1.msra.mxu0 0.0
        %1427 = vmatprep.subr.mxu0 0.0
        %1428 = vmatpush1.msra.mxu0 0.0
        %1429 = vmatprep.subr.mxu0 0.0
        %1430 = vmatpush1.msra.mxu0 0.0
        %1431 = vmatprep.subr.mxu0 0.0
        %1432 = vmatpush1.msra.mxu0 0.0
        %1433 = vmatprep.subr.mxu0 0.0
        %1434 = vmatpush1.msra.mxu0 0.0
        %1435 = vmatprep.subr.mxu0 0.0
        %1436 = vmatpush1.msra.mxu0 0.0
        %1437 = vmatprep.subr.mxu0 0.0
        %1438 = vmatpush1.msra.mxu0 0.0
        %1439 = vmatprep.subr.mxu0 0.0
        %1440 = vmatpush1.msra.mxu0 0.0
        %1441 = vmatprep.subr.mxu0 0.0
        %1442 = vmatpush1.msra.mxu0 0.0
        %1443 = vmatprep.subr.mxu0 0.0
        %1444 = vmatpush1.msra.mxu0 0.0
        %1445 = vmatprep.subr.mxu0 0.0
        %1446 = vmatpush1.msra.mxu0 0.0
        %1447 = vmatprep.subr.mxu0 0.0
        %1448 = vmatpush1.msra.mxu0 0.0
        %1449 = vmatprep.subr.mxu0 0.0
        %1450 = vmatpush1.msra.mxu0 0.0
        %1451 = vmatprep.subr.mxu0 0.0
        %1452 = vmatpush1.msra.mxu0 0.0
        %1453 = vmatprep.subr.mxu0 0.0
        %1454 = vmatpush1.msra.mxu0 0.0
        %1455 = vmatprep.mubr.f32.mxu0 0.0
        %1456 = vmatmul.mubr.f32.gmra.mrb[0].mxu0 %v1389
        %v1457 = vpop.f32.mrb[0].mxu0
        %v1458 = vadd.f32 0.0, %v1457
        %v1459 = vpop.f32.mrb[0].mxu0
        %1460 = vdwg.mxu0
        %s1461 = scalar_lea.vmem [#allocation7], 16
        %v1462 = vld [vmem:[%s1461] sm:$0xf]
        %v1464 = vsel %vm324, %v1458, 0
        %v1467 = vsel %vm658, %v1462, 0
        %1469 = vmatprep.subr.mxu0 0.0
        %1470 = vmatpush1.msra.mxu0 %v1467
        %1471 = vmatprep.subr.mxu0 0.0
        %1472 = vmatpush1.msra.mxu0 0.0
        %1473 = vmatprep.subr.mxu0 0.0
        %1474 = vmatpush1.msra.mxu0 0.0
        %1475 = vmatprep.subr.mxu0 0.0
        %1476 = vmatpush1.msra.mxu0 0.0
        %1477 = vmatprep.subr.mxu0 0.0
        %1478 = vmatpush1.msra.mxu0 0.0
        %1479 = vmatprep.subr.mxu0 0.0
        %1480 = vmatpush1.msra.mxu0 0.0
        %1481 = vmatprep.subr.mxu0 0.0
        %1482 = vmatpush1.msra.mxu0 0.0
        %1483 = vmatprep.subr.mxu0 0.0
        %1484 = vmatpush1.msra.mxu0 0.0
        %1485 = vmatprep.subr.mxu0 0.0
        %1486 = vmatpush1.msra.mxu0 0.0
        %1487 = vmatprep.subr.mxu0 0.0
        %1488 = vmatpush1.msra.mxu0 0.0
        %1489 = vmatprep.subr.mxu0 0.0
        %1490 = vmatpush1.msra.mxu0 0.0
        %1491 = vmatprep.subr.mxu0 0.0
        %1492 = vmatpush1.msra.mxu0 0.0
        %1493 = vmatprep.subr.mxu0 0.0
        %1494 = vmatpush1.msra.mxu0 0.0
        %1495 = vmatprep.subr.mxu0 0.0
        %1496 = vmatpush1.msra.mxu0 0.0
        %1497 = vmatprep.subr.mxu0 0.0
        %1498 = vmatpush1.msra.mxu0 0.0
        %1499 = vmatprep.subr.mxu0 0.0
        %1500 = vmatpush1.msra.mxu0 0.0
        %1501 = vmatprep.subr.mxu0 0.0
        %1502 = vmatpush1.msra.mxu0 0.0
        %1503 = vmatprep.subr.mxu0 0.0
        %1504 = vmatpush1.msra.mxu0 0.0
        %1505 = vmatprep.subr.mxu0 0.0
        %1506 = vmatpush1.msra.mxu0 0.0
        %1507 = vmatprep.subr.mxu0 0.0
        %1508 = vmatpush1.msra.mxu0 0.0
        %1509 = vmatprep.subr.mxu0 0.0
        %1510 = vmatpush1.msra.mxu0 0.0
        %1511 = vmatprep.subr.mxu0 0.0
        %1512 = vmatpush1.msra.mxu0 0.0
        %1513 = vmatprep.subr.mxu0 0.0
        %1514 = vmatpush1.msra.mxu0 0.0
        %1515 = vmatprep.subr.mxu0 0.0
        %1516 = vmatpush1.msra.mxu0 0.0
        %1517 = vmatprep.subr.mxu0 0.0
        %1518 = vmatpush1.msra.mxu0 0.0
        %1519 = vmatprep.subr.mxu0 0.0
        %1520 = vmatpush1.msra.mxu0 0.0
        %1521 = vmatprep.subr.mxu0 0.0
        %1522 = vmatpush1.msra.mxu0 0.0
        %1523 = vmatprep.subr.mxu0 0.0
        %1524 = vmatpush1.msra.mxu0 0.0
        %1525 = vmatprep.subr.mxu0 0.0
        %1526 = vmatpush1.msra.mxu0 0.0
        %1527 = vmatprep.subr.mxu0 0.0
        %1528 = vmatpush1.msra.mxu0 0.0
        %1529 = vmatprep.subr.mxu0 0.0
        %1530 = vmatpush1.msra.mxu0 0.0
        %1531 = vmatprep.subr.mxu0 0.0
        %1532 = vmatpush1.msra.mxu0 0.0
        %1533 = vmatprep.mubr.f32.mxu0 0.0
        %1534 = vmatmul.mubr.f32.gmra.mrb[0].mxu0 %v1464
        %v1535 = vpop.f32.mrb[0].mxu0
        %v1536 = vadd.f32 0.0, %v1535
        %v1537 = vpop.f32.mrb[0].mxu0
        %1538 = vdwg.mxu0
        %v1539 = vadd.f32 %v1295, %v1536
        %1540 = vrot.lane.b32.xlu0 %v318, 108
        %v1541 = vpop.permute.xlu0 %1540
        %1542 = vrot.lane.b32.xlu0 %v318, 76
        %v1543 = vpop.permute.xlu0 %1542
        %v1544 = vsel %vm324, %v1541, 0
        %v1546 = vsel %vm324, %v1543, 0
        %1548 = vmatprep.subr.mxu0 0.0
        %1549 = vmatpush1.xpose.msra.mxu0 %v1546
        %1550 = vmatprep.subr.mxu0 0.0
        %1551 = vmatpush1.xpose.msra.mxu0 0.0
        %1552 = vmatprep.subr.mxu0 0.0
        %1553 = vmatpush1.xpose.msra.mxu0 0.0
        %1554 = vmatprep.subr.mxu0 0.0
        %1555 = vmatpush1.xpose.msra.mxu0 0.0
        %1556 = vmatprep.subr.mxu0 0.0
        %1557 = vmatpush1.xpose.msra.mxu0 0.0
        %1558 = vmatprep.subr.mxu0 0.0
        %1559 = vmatpush1.xpose.msra.mxu0 0.0
        %1560 = vmatprep.subr.mxu0 0.0
        %1561 = vmatpush1.xpose.msra.mxu0 0.0
        %1562 = vmatprep.subr.mxu0 0.0
        %1563 = vmatpush1.xpose.msra.mxu0 0.0
        %1564 = vmatprep.subr.mxu0 0.0
        %1565 = vmatpush1.xpose.msra.mxu0 0.0
        %1566 = vmatprep.subr.mxu0 0.0
        %1567 = vmatpush1.xpose.msra.mxu0 0.0
        %1568 = vmatprep.subr.mxu0 0.0
        %1569 = vmatpush1.xpose.msra.mxu0 0.0
        %1570 = vmatprep.subr.mxu0 0.0
        %1571 = vmatpush1.xpose.msra.mxu0 0.0
        %1572 = vmatprep.subr.mxu0 0.0
        %1573 = vmatpush1.xpose.msra.mxu0 0.0
        %1574 = vmatprep.subr.mxu0 0.0
        %1575 = vmatpush1.xpose.msra.mxu0 0.0
        %1576 = vmatprep.subr.mxu0 0.0
        %1577 = vmatpush1.xpose.msra.mxu0 0.0
        %1578 = vmatprep.subr.mxu0 0.0
        %1579 = vmatpush1.xpose.msra.mxu0 0.0
        %1580 = vmatprep.subr.mxu0 0.0
        %1581 = vmatpush1.xpose.msra.mxu0 0.0
        %1582 = vmatprep.subr.mxu0 0.0
        %1583 = vmatpush1.xpose.msra.mxu0 0.0
        %1584 = vmatprep.subr.mxu0 0.0
        %1585 = vmatpush1.xpose.msra.mxu0 0.0
        %1586 = vmatprep.subr.mxu0 0.0
        %1587 = vmatpush1.xpose.msra.mxu0 0.0
        %1588 = vmatprep.subr.mxu0 0.0
        %1589 = vmatpush1.xpose.msra.mxu0 0.0
        %1590 = vmatprep.subr.mxu0 0.0
        %1591 = vmatpush1.xpose.msra.mxu0 0.0
        %1592 = vmatprep.subr.mxu0 0.0
        %1593 = vmatpush1.xpose.msra.mxu0 0.0
        %1594 = vmatprep.subr.mxu0 0.0
        %1595 = vmatpush1.xpose.msra.mxu0 0.0
        %1596 = vmatprep.subr.mxu0 0.0
        %1597 = vmatpush1.xpose.msra.mxu0 0.0
        %1598 = vmatprep.subr.mxu0 0.0
        %1599 = vmatpush1.xpose.msra.mxu0 0.0
        %1600 = vmatprep.subr.mxu0 0.0
        %1601 = vmatpush1.xpose.msra.mxu0 0.0
        %1602 = vmatprep.subr.mxu0 0.0
        %1603 = vmatpush1.xpose.msra.mxu0 0.0
        %1604 = vmatprep.subr.mxu0 0.0
        %1605 = vmatpush1.xpose.msra.mxu0 0.0
        %1606 = vmatprep.subr.mxu0 0.0
        %1607 = vmatpush1.xpose.msra.mxu0 0.0
        %1608 = vmatprep.subr.mxu0 0.0
        %1609 = vmatpush1.xpose.msra.mxu0 0.0
        %1610 = vmatprep.subr.mxu0 0.0
        %1611 = vmatpush1.xpose.msra.mxu0 0.0
        %1612 = vmatprep.mubr.f32.mxu0 0.0
        %1613 = vmatmul.mubr.f32.gmra.mrb[0].mxu0 %v1544
        %v1614 = vpop.f32.mrb[0].mxu0
        %v1615 = vadd.f32 0.0, %v1614
        %v1616 = vpop.f32.mrb[0].mxu0
        %1617 = vdwg.mxu0
        %v1618 = vsel %vm399, %v1615, -inf
        %1619 = vmax.xlane.f32.xlu0 %v1618
        %v1620 = vpop.xlane.xlu0 %1619
        %v1621 = vsub.f32 %v1615, %v1620
        %v1622 = vmul.f32 %v1621, 1.442695
        %v1623 = vpow.pop %v1622
        %v1624 = vsel %vm399, %v1623, 0.0
        %1625 = vadd.xlane.f32.xlu0 %v1624
        %v1626 = vpop.xlane.xlu0 %1625
        %v1627 = vrcp.pop %v1626
        %v1628 = vmul.f32 %v1623, %v1627
        %1629 = vrot.lane.b32.xlu0 %v318, 44
        %v1630 = vpop.permute.xlu0 %1629
        %v1633 = vsel %vm399, %v1628, 0
        %1635 = vmatprep.subr.mxu0 0.0
        %1636 = vmatpush1.msra.mxu0 %v1630
        %1637 = vmatprep.subr.mxu0 0.0
        %1638 = vmatpush1.msra.mxu0 0.0
        %1639 = vmatprep.subr.mxu0 0.0
        %1640 = vmatpush1.msra.mxu0 0.0
        %1641 = vmatprep.subr.mxu0 0.0
        %1642 = vmatpush1.msra.mxu0 0.0
        %1643 = vmatprep.subr.mxu0 0.0
        %1644 = vmatpush1.msra.mxu0 0.0
        %1645 = vmatprep.subr.mxu0 0.0
        %1646 = vmatpush1.msra.mxu0 0.0
        %1647 = vmatprep.subr.mxu0 0.0
        %1648 = vmatpush1.msra.mxu0 0.0
        %1649 = vmatprep.subr.mxu0 0.0
        %1650 = vmatpush1.msra.mxu0 0.0
        %1651 = vmatprep.subr.mxu0 0.0
        %1652 = vmatpush1.msra.mxu0 0.0
        %1653 = vmatprep.subr.mxu0 0.0
        %1654 = vmatpush1.msra.mxu0 0.0
        %1655 = vmatprep.subr.mxu0 0.0
        %1656 = vmatpush1.msra.mxu0 0.0
        %1657 = vmatprep.subr.mxu0 0.0
        %1658 = vmatpush1.msra.mxu0 0.0
        %1659 = vmatprep.subr.mxu0 0.0
        %1660 = vmatpush1.msra.mxu0 0.0
        %1661 = vmatprep.subr.mxu0 0.0
        %1662 = vmatpush1.msra.mxu0 0.0
        %1663 = vmatprep.subr.mxu0 0.0
        %1664 = vmatpush1.msra.mxu0 0.0
        %1665 = vmatprep.subr.mxu0 0.0
        %1666 = vmatpush1.msra.mxu0 0.0
        %1667 = vmatprep.subr.mxu0 0.0
        %1668 = vmatpush1.msra.mxu0 0.0
        %1669 = vmatprep.subr.mxu0 0.0
        %1670 = vmatpush1.msra.mxu0 0.0
        %1671 = vmatprep.subr.mxu0 0.0
        %1672 = vmatpush1.msra.mxu0 0.0
        %1673 = vmatprep.subr.mxu0 0.0
        %1674 = vmatpush1.msra.mxu0 0.0
        %1675 = vmatprep.subr.mxu0 0.0
        %1676 = vmatpush1.msra.mxu0 0.0
        %1677 = vmatprep.subr.mxu0 0.0
        %1678 = vmatpush1.msra.mxu0 0.0
        %1679 = vmatprep.subr.mxu0 0.0
        %1680 = vmatpush1.msra.mxu0 0.0
        %1681 = vmatprep.subr.mxu0 0.0
        %1682 = vmatpush1.msra.mxu0 0.0
        %1683 = vmatprep.subr.mxu0 0.0
        %1684 = vmatpush1.msra.mxu0 0.0
        %1685 = vmatprep.subr.mxu0 0.0
        %1686 = vmatpush1.msra.mxu0 0.0
        %1687 = vmatprep.subr.mxu0 0.0
        %1688 = vmatpush1.msra.mxu0 0.0
        %1689 = vmatprep.subr.mxu0 0.0
        %1690 = vmatpush1.msra.mxu0 0.0
        %1691 = vmatprep.subr.mxu0 0.0
        %1692 = vmatpush1.msra.mxu0 0.0
        %1693 = vmatprep.subr.mxu0 0.0
        %1694 = vmatpush1.msra.mxu0 0.0
        %1695 = vmatprep.subr.mxu0 0.0
        %1696 = vmatpush1.msra.mxu0 0.0
        %1697 = vmatprep.subr.mxu0 0.0
        %1698 = vmatpush1.msra.mxu0 0.0
        %1699 = vmatprep.mubr.f32.mxu0 0.0
        %1700 = vmatmul.mubr.f32.gmra.mrb[0].mxu0 %v1633
        %v1701 = vpop.f32.mrb[0].mxu0
        %v1702 = vadd.f32 0.0, %v1701
        %v1703 = vpop.f32.mrb[0].mxu0
        %1704 = vdwg.mxu0
        %s1705 = scalar_lea.vmem [#allocation7], 20
        %v1706 = vld [vmem:[%s1705] sm:$0xf]
        %v1708 = vsel %vm324, %v1702, 0
        %v1711 = vsel %vm658, %v1706, 0
        %1713 = vmatprep.subr.mxu0 0.0
        %1714 = vmatpush1.msra.mxu0 %v1711
        %1715 = vmatprep.subr.mxu0 0.0
        %1716 = vmatpush1.msra.mxu0 0.0
        %1717 = vmatprep.subr.mxu0 0.0
        %1718 = vmatpush1.msra.mxu0 0.0
        %1719 = vmatprep.subr.mxu0 0.0
        %1720 = vmatpush1.msra.mxu0 0.0
        %1721 = vmatprep.subr.mxu0 0.0
        %1722 = vmatpush1.msra.mxu0 0.0
        %1723 = vmatprep.subr.mxu0 0.0
        %1724 = vmatpush1.msra.mxu0 0.0
        %1725 = vmatprep.subr.mxu0 0.0
        %1726 = vmatpush1.msra.mxu0 0.0
        %1727 = vmatprep.subr.mxu0 0.0
        %1728 = vmatpush1.msra.mxu0 0.0
        %1729 = vmatprep.subr.mxu0 0.0
        %1730 = vmatpush1.msra.mxu0 0.0
        %1731 = vmatprep.subr.mxu0 0.0
        %1732 = vmatpush1.msra.mxu0 0.0
        %1733 = vmatprep.subr.mxu0 0.0
        %1734 = vmatpush1.msra.mxu0 0.0
        %1735 = vmatprep.subr.mxu0 0.0
        %1736 = vmatpush1.msra.mxu0 0.0
        %1737 = vmatprep.subr.mxu0 0.0
        %1738 = vmatpush1.msra.mxu0 0.0
        %1739 = vmatprep.subr.mxu0 0.0
        %1740 = vmatpush1.msra.mxu0 0.0
        %1741 = vmatprep.subr.mxu0 0.0
        %1742 = vmatpush1.msra.mxu0 0.0
        %1743 = vmatprep.subr.mxu0 0.0
        %1744 = vmatpush1.msra.mxu0 0.0
        %1745 = vmatprep.subr.mxu0 0.0
        %1746 = vmatpush1.msra.mxu0 0.0
        %1747 = vmatprep.subr.mxu0 0.0
        %1748 = vmatpush1.msra.mxu0 0.0
        %1749 = vmatprep.subr.mxu0 0.0
        %1750 = vmatpush1.msra.mxu0 0.0
        %1751 = vmatprep.subr.mxu0 0.0
        %1752 = vmatpush1.msra.mxu0 0.0
        %1753 = vmatprep.subr.mxu0 0.0
        %1754 = vmatpush1.msra.mxu0 0.0
        %1755 = vmatprep.subr.mxu0 0.0
        %1756 = vmatpush1.msra.mxu0 0.0
        %1757 = vmatprep.subr.mxu0 0.0
        %1758 = vmatpush1.msra.mxu0 0.0
        %1759 = vmatprep.subr.mxu0 0.0
        %1760 = vmatpush1.msra.mxu0 0.0
        %1761 = vmatprep.subr.mxu0 0.0
        %1762 = vmatpush1.msra.mxu0 0.0
        %1763 = vmatprep.subr.mxu0 0.0
        %1764 = vmatpush1.msra.mxu0 0.0
        %1765 = vmatprep.subr.mxu0 0.0
        %1766 = vmatpush1.msra.mxu0 0.0
        %1767 = vmatprep.subr.mxu0 0.0
        %1768 = vmatpush1.msra.mxu0 0.0
        %1769 = vmatprep.subr.mxu0 0.0
        %1770 = vmatpush1.msra.mxu0 0.0
        %1771 = vmatprep.subr.mxu0 0.0
        %1772 = vmatpush1.msra.mxu0 0.0
        %1773 = vmatprep.subr.mxu0 0.0
        %1774 = vmatpush1.msra.mxu0 0.0
        %1775 = vmatprep.subr.mxu0 0.0
        %1776 = vmatpush1.msra.mxu0 0.0
        %1777 = vmatprep.mubr.f32.mxu0 0.0
        %1778 = vmatmul.mubr.f32.gmra.mrb[0].mxu0 %v1708
        %v1779 = vpop.f32.mrb[0].mxu0
        %v1780 = vadd.f32 0.0, %v1779
        %v1781 = vpop.f32.mrb[0].mxu0
        %1782 = vdwg.mxu0
        %v1783 = vadd.f32 %v1539, %v1780
        %1784 = vrot.lane.b32.xlu0 %v318, 104
        %v1785 = vpop.permute.xlu0 %1784
        %1786 = vrot.lane.b32.xlu0 %v318, 72
        %v1787 = vpop.permute.xlu0 %1786
        %v1788 = vsel %vm324, %v1785, 0
        %v1790 = vsel %vm324, %v1787, 0
        %1792 = vmatprep.subr.mxu0 0.0
        %1793 = vmatpush1.xpose.msra.mxu0 %v1790
        %1794 = vmatprep.subr.mxu0 0.0
        %1795 = vmatpush1.xpose.msra.mxu0 0.0
        %1796 = vmatprep.subr.mxu0 0.0
        %1797 = vmatpush1.xpose.msra.mxu0 0.0
        %1798 = vmatprep.subr.mxu0 0.0
        %1799 = vmatpush1.xpose.msra.mxu0 0.0
        %1800 = vmatprep.subr.mxu0 0.0
        %1801 = vmatpush1.xpose.msra.mxu0 0.0
        %1802 = vmatprep.subr.mxu0 0.0
        %1803 = vmatpush1.xpose.msra.mxu0 0.0
        %1804 = vmatprep.subr.mxu0 0.0
        %1805 = vmatpush1.xpose.msra.mxu0 0.0
        %1806 = vmatprep.subr.mxu0 0.0
        %1807 = vmatpush1.xpose.msra.mxu0 0.0
        %1808 = vmatprep.subr.mxu0 0.0
        %1809 = vmatpush1.xpose.msra.mxu0 0.0
        %1810 = vmatprep.subr.mxu0 0.0
        %1811 = vmatpush1.xpose.msra.mxu0 0.0
        %1812 = vmatprep.subr.mxu0 0.0
        %1813 = vmatpush1.xpose.msra.mxu0 0.0
        %1814 = vmatprep.subr.mxu0 0.0
        %1815 = vmatpush1.xpose.msra.mxu0 0.0
        %1816 = vmatprep.subr.mxu0 0.0
        %1817 = vmatpush1.xpose.msra.mxu0 0.0
        %1818 = vmatprep.subr.mxu0 0.0
        %1819 = vmatpush1.xpose.msra.mxu0 0.0
        %1820 = vmatprep.subr.mxu0 0.0
        %1821 = vmatpush1.xpose.msra.mxu0 0.0
        %1822 = vmatprep.subr.mxu0 0.0
        %1823 = vmatpush1.xpose.msra.mxu0 0.0
        %1824 = vmatprep.subr.mxu0 0.0
        %1825 = vmatpush1.xpose.msra.mxu0 0.0
        %1826 = vmatprep.subr.mxu0 0.0
        %1827 = vmatpush1.xpose.msra.mxu0 0.0
        %1828 = vmatprep.subr.mxu0 0.0
        %1829 = vmatpush1.xpose.msra.mxu0 0.0
        %1830 = vmatprep.subr.mxu0 0.0
        %1831 = vmatpush1.xpose.msra.mxu0 0.0
        %1832 = vmatprep.subr.mxu0 0.0
        %1833 = vmatpush1.xpose.msra.mxu0 0.0
        %1834 = vmatprep.subr.mxu0 0.0
        %1835 = vmatpush1.xpose.msra.mxu0 0.0
        %1836 = vmatprep.subr.mxu0 0.0
        %1837 = vmatpush1.xpose.msra.mxu0 0.0
        %1838 = vmatprep.subr.mxu0 0.0
        %1839 = vmatpush1.xpose.msra.mxu0 0.0
        %1840 = vmatprep.subr.mxu0 0.0
        %1841 = vmatpush1.xpose.msra.mxu0 0.0
        %1842 = vmatprep.subr.mxu0 0.0
        %1843 = vmatpush1.xpose.msra.mxu0 0.0
        %1844 = vmatprep.subr.mxu0 0.0
        %1845 = vmatpush1.xpose.msra.mxu0 0.0
        %1846 = vmatprep.subr.mxu0 0.0
        %1847 = vmatpush1.xpose.msra.mxu0 0.0
        %1848 = vmatprep.subr.mxu0 0.0
        %1849 = vmatpush1.xpose.msra.mxu0 0.0
        %1850 = vmatprep.subr.mxu0 0.0
        %1851 = vmatpush1.xpose.msra.mxu0 0.0
        %1852 = vmatprep.subr.mxu0 0.0
        %1853 = vmatpush1.xpose.msra.mxu0 0.0
        %1854 = vmatprep.subr.mxu0 0.0
        %1855 = vmatpush1.xpose.msra.mxu0 0.0
        %1856 = vmatprep.mubr.f32.mxu0 0.0
        %1857 = vmatmul.mubr.f32.gmra.mrb[0].mxu0 %v1788
        %v1858 = vpop.f32.mrb[0].mxu0
        %v1859 = vadd.f32 0.0, %v1858
        %v1860 = vpop.f32.mrb[0].mxu0
        %1861 = vdwg.mxu0
        %v1862 = vsel %vm399, %v1859, -inf
        %1863 = vmax.xlane.f32.xlu0 %v1862
        %v1864 = vpop.xlane.xlu0 %1863
        %v1865 = vsub.f32 %v1859, %v1864
        %v1866 = vmul.f32 %v1865, 1.442695
        %v1867 = vpow.pop %v1866
        %v1868 = vsel %vm399, %v1867, 0.0
        %1869 = vadd.xlane.f32.xlu0 %v1868
        %v1870 = vpop.xlane.xlu0 %1869
        %v1871 = vrcp.pop %v1870
        %v1872 = vmul.f32 %v1867, %v1871
        %1873 = vrot.lane.b32.xlu0 %v318, 40
        %v1874 = vpop.permute.xlu0 %1873
        %v1877 = vsel %vm399, %v1872, 0
        %1879 = vmatprep.subr.mxu0 0.0
        %1880 = vmatpush1.msra.mxu0 %v1874
        %1881 = vmatprep.subr.mxu0 0.0
        %1882 = vmatpush1.msra.mxu0 0.0
        %1883 = vmatprep.subr.mxu0 0.0
        %1884 = vmatpush1.msra.mxu0 0.0
        %1885 = vmatprep.subr.mxu0 0.0
        %1886 = vmatpush1.msra.mxu0 0.0
        %1887 = vmatprep.subr.mxu0 0.0
        %1888 = vmatpush1.msra.mxu0 0.0
        %1889 = vmatprep.subr.mxu0 0.0
        %1890 = vmatpush1.msra.mxu0 0.0
        %1891 = vmatprep.subr.mxu0 0.0
        %1892 = vmatpush1.msra.mxu0 0.0
        %1893 = vmatprep.subr.mxu0 0.0
        %1894 = vmatpush1.msra.mxu0 0.0
        %1895 = vmatprep.subr.mxu0 0.0
        %1896 = vmatpush1.msra.mxu0 0.0
        %1897 = vmatprep.subr.mxu0 0.0
        %1898 = vmatpush1.msra.mxu0 0.0
        %1899 = vmatprep.subr.mxu0 0.0
        %1900 = vmatpush1.msra.mxu0 0.0
        %1901 = vmatprep.subr.mxu0 0.0
        %1902 = vmatpush1.msra.mxu0 0.0
        %1903 = vmatprep.subr.mxu0 0.0
        %1904 = vmatpush1.msra.mxu0 0.0
        %1905 = vmatprep.subr.mxu0 0.0
        %1906 = vmatpush1.msra.mxu0 0.0
        %1907 = vmatprep.subr.mxu0 0.0
        %1908 = vmatpush1.msra.mxu0 0.0
        %1909 = vmatprep.subr.mxu0 0.0
        %1910 = vmatpush1.msra.mxu0 0.0
        %1911 = vmatprep.subr.mxu0 0.0
        %1912 = vmatpush1.msra.mxu0 0.0
        %1913 = vmatprep.subr.mxu0 0.0
        %1914 = vmatpush1.msra.mxu0 0.0
        %1915 = vmatprep.subr.mxu0 0.0
        %1916 = vmatpush1.msra.mxu0 0.0
        %1917 = vmatprep.subr.mxu0 0.0
        %1918 = vmatpush1.msra.mxu0 0.0
        %1919 = vmatprep.subr.mxu0 0.0
        %1920 = vmatpush1.msra.mxu0 0.0
        %1921 = vmatprep.subr.mxu0 0.0
        %1922 = vmatpush1.msra.mxu0 0.0
        %1923 = vmatprep.subr.mxu0 0.0
        %1924 = vmatpush1.msra.mxu0 0.0
        %1925 = vmatprep.subr.mxu0 0.0
        %1926 = vmatpush1.msra.mxu0 0.0
        %1927 = vmatprep.subr.mxu0 0.0
        %1928 = vmatpush1.msra.mxu0 0.0
        %1929 = vmatprep.subr.mxu0 0.0
        %1930 = vmatpush1.msra.mxu0 0.0
        %1931 = vmatprep.subr.mxu0 0.0
        %1932 = vmatpush1.msra.mxu0 0.0
        %1933 = vmatprep.subr.mxu0 0.0
        %1934 = vmatpush1.msra.mxu0 0.0
        %1935 = vmatprep.subr.mxu0 0.0
        %1936 = vmatpush1.msra.mxu0 0.0
        %1937 = vmatprep.subr.mxu0 0.0
        %1938 = vmatpush1.msra.mxu0 0.0
        %1939 = vmatprep.subr.mxu0 0.0
        %1940 = vmatpush1.msra.mxu0 0.0
        %1941 = vmatprep.subr.mxu0 0.0
        %1942 = vmatpush1.msra.mxu0 0.0
        %1943 = vmatprep.mubr.f32.mxu0 0.0
        %1944 = vmatmul.mubr.f32.gmra.mrb[0].mxu0 %v1877
        %v1945 = vpop.f32.mrb[0].mxu0
        %v1946 = vadd.f32 0.0, %v1945
        %v1947 = vpop.f32.mrb[0].mxu0
        %1948 = vdwg.mxu0
        %s1949 = scalar_lea.vmem [#allocation7], 24
        %v1950 = vld [vmem:[%s1949] sm:$0xf]
        %v1952 = vsel %vm324, %v1946, 0
        %v1955 = vsel %vm658, %v1950, 0
        %1957 = vmatprep.subr.mxu0 0.0
        %1958 = vmatpush1.msra.mxu0 %v1955
        %1959 = vmatprep.subr.mxu0 0.0
        %1960 = vmatpush1.msra.mxu0 0.0
        %1961 = vmatprep.subr.mxu0 0.0
        %1962 = vmatpush1.msra.mxu0 0.0
        %1963 = vmatprep.subr.mxu0 0.0
        %1964 = vmatpush1.msra.mxu0 0.0
        %1965 = vmatprep.subr.mxu0 0.0
        %1966 = vmatpush1.msra.mxu0 0.0
        %1967 = vmatprep.subr.mxu0 0.0
        %1968 = vmatpush1.msra.mxu0 0.0
        %1969 = vmatprep.subr.mxu0 0.0
        %1970 = vmatpush1.msra.mxu0 0.0
        %1971 = vmatprep.subr.mxu0 0.0
        %1972 = vmatpush1.msra.mxu0 0.0
        %1973 = vmatprep.subr.mxu0 0.0
        %1974 = vmatpush1.msra.mxu0 0.0
        %1975 = vmatprep.subr.mxu0 0.0
        %1976 = vmatpush1.msra.mxu0 0.0
        %1977 = vmatprep.subr.mxu0 0.0
        %1978 = vmatpush1.msra.mxu0 0.0
        %1979 = vmatprep.subr.mxu0 0.0
        %1980 = vmatpush1.msra.mxu0 0.0
        %1981 = vmatprep.subr.mxu0 0.0
        %1982 = vmatpush1.msra.mxu0 0.0
        %1983 = vmatprep.subr.mxu0 0.0
        %1984 = vmatpush1.msra.mxu0 0.0
        %1985 = vmatprep.subr.mxu0 0.0
        %1986 = vmatpush1.msra.mxu0 0.0
        %1987 = vmatprep.subr.mxu0 0.0
        %1988 = vmatpush1.msra.mxu0 0.0
        %1989 = vmatprep.subr.mxu0 0.0
        %1990 = vmatpush1.msra.mxu0 0.0
        %1991 = vmatprep.subr.mxu0 0.0
        %1992 = vmatpush1.msra.mxu0 0.0
        %1993 = vmatprep.subr.mxu0 0.0
        %1994 = vmatpush1.msra.mxu0 0.0
        %1995 = vmatprep.subr.mxu0 0.0
        %1996 = vmatpush1.msra.mxu0 0.0
        %1997 = vmatprep.subr.mxu0 0.0
        %1998 = vmatpush1.msra.mxu0 0.0
        %1999 = vmatprep.subr.mxu0 0.0
        %2000 = vmatpush1.msra.mxu0 0.0
        %2001 = vmatprep.subr.mxu0 0.0
        %2002 = vmatpush1.msra.mxu0 0.0
        %2003 = vmatprep.subr.mxu0 0.0
        %2004 = vmatpush1.msra.mxu0 0.0
        %2005 = vmatprep.subr.mxu0 0.0
        %2006 = vmatpush1.msra.mxu0 0.0
        %2007 = vmatprep.subr.mxu0 0.0
        %2008 = vmatpush1.msra.mxu0 0.0
        %2009 = vmatprep.subr.mxu0 0.0
        %2010 = vmatpush1.msra.mxu0 0.0
        %2011 = vmatprep.subr.mxu0 0.0
        %2012 = vmatpush1.msra.mxu0 0.0
        %2013 = vmatprep.subr.mxu0 0.0
        %2014 = vmatpush1.msra.mxu0 0.0
        %2015 = vmatprep.subr.mxu0 0.0
        %2016 = vmatpush1.msra.mxu0 0.0
        %2017 = vmatprep.subr.mxu0 0.0
        %2018 = vmatpush1.msra.mxu0 0.0
        %2019 = vmatprep.subr.mxu0 0.0
        %2020 = vmatpush1.msra.mxu0 0.0
        %2021 = vmatprep.mubr.f32.mxu0 0.0
        %2022 = vmatmul.mubr.f32.gmra.mrb[0].mxu0 %v1952
        %v2023 = vpop.f32.mrb[0].mxu0
        %v2024 = vadd.f32 0.0, %v2023
        %v2025 = vpop.f32.mrb[0].mxu0
        %2026 = vdwg.mxu0
        %v2027 = vadd.f32 %v1783, %v2024
        %2028 = vrot.lane.b32.xlu0 %v318, 100
        %v2029 = vpop.permute.xlu0 %2028
        %2030 = vrot.lane.b32.xlu0 %v318, 68
        %v2031 = vpop.permute.xlu0 %2030
        %v2032 = vsel %vm324, %v2029, 0
        %v2034 = vsel %vm324, %v2031, 0
        %2036 = vmatprep.subr.mxu0 0.0
        %2037 = vmatpush1.xpose.msra.mxu0 %v2034
        %2038 = vmatprep.subr.mxu0 0.0
        %2039 = vmatpush1.xpose.msra.mxu0 0.0
        %2040 = vmatprep.subr.mxu0 0.0
        %2041 = vmatpush1.xpose.msra.mxu0 0.0
        %2042 = vmatprep.subr.mxu0 0.0
        %2043 = vmatpush1.xpose.msra.mxu0 0.0
        %2044 = vmatprep.subr.mxu0 0.0
        %2045 = vmatpush1.xpose.msra.mxu0 0.0
        %2046 = vmatprep.subr.mxu0 0.0
        %2047 = vmatpush1.xpose.msra.mxu0 0.0
        %2048 = vmatprep.subr.mxu0 0.0
        %2049 = vmatpush1.xpose.msra.mxu0 0.0
        %2050 = vmatprep.subr.mxu0 0.0
        %2051 = vmatpush1.xpose.msra.mxu0 0.0
        %2052 = vmatprep.subr.mxu0 0.0
        %2053 = vmatpush1.xpose.msra.mxu0 0.0
        %2054 = vmatprep.subr.mxu0 0.0
        %2055 = vmatpush1.xpose.msra.mxu0 0.0
        %2056 = vmatprep.subr.mxu0 0.0
        %2057 = vmatpush1.xpose.msra.mxu0 0.0
        %2058 = vmatprep.subr.mxu0 0.0
        %2059 = vmatpush1.xpose.msra.mxu0 0.0
        %2060 = vmatprep.subr.mxu0 0.0
        %2061 = vmatpush1.xpose.msra.mxu0 0.0
        %2062 = vmatprep.subr.mxu0 0.0
        %2063 = vmatpush1.xpose.msra.mxu0 0.0
        %2064 = vmatprep.subr.mxu0 0.0
        %2065 = vmatpush1.xpose.msra.mxu0 0.0
        %2066 = vmatprep.subr.mxu0 0.0
        %2067 = vmatpush1.xpose.msra.mxu0 0.0
        %2068 = vmatprep.subr.mxu0 0.0
        %2069 = vmatpush1.xpose.msra.mxu0 0.0
        %2070 = vmatprep.subr.mxu0 0.0
        %2071 = vmatpush1.xpose.msra.mxu0 0.0
        %2072 = vmatprep.subr.mxu0 0.0
        %2073 = vmatpush1.xpose.msra.mxu0 0.0
        %2074 = vmatprep.subr.mxu0 0.0
        %2075 = vmatpush1.xpose.msra.mxu0 0.0
        %2076 = vmatprep.subr.mxu0 0.0
        %2077 = vmatpush1.xpose.msra.mxu0 0.0
        %2078 = vmatprep.subr.mxu0 0.0
        %2079 = vmatpush1.xpose.msra.mxu0 0.0
        %2080 = vmatprep.subr.mxu0 0.0
        %2081 = vmatpush1.xpose.msra.mxu0 0.0
        %2082 = vmatprep.subr.mxu0 0.0
        %2083 = vmatpush1.xpose.msra.mxu0 0.0
        %2084 = vmatprep.subr.mxu0 0.0
        %2085 = vmatpush1.xpose.msra.mxu0 0.0
        %2086 = vmatprep.subr.mxu0 0.0
        %2087 = vmatpush1.xpose.msra.mxu0 0.0
        %2088 = vmatprep.subr.mxu0 0.0
        %2089 = vmatpush1.xpose.msra.mxu0 0.0
        %2090 = vmatprep.subr.mxu0 0.0
        %2091 = vmatpush1.xpose.msra.mxu0 0.0
        %2092 = vmatprep.subr.mxu0 0.0
        %2093 = vmatpush1.xpose.msra.mxu0 0.0
        %2094 = vmatprep.subr.mxu0 0.0
        %2095 = vmatpush1.xpose.msra.mxu0 0.0
        %2096 = vmatprep.subr.mxu0 0.0
        %2097 = vmatpush1.xpose.msra.mxu0 0.0
        %2098 = vmatprep.subr.mxu0 0.0
        %2099 = vmatpush1.xpose.msra.mxu0 0.0
        %2100 = vmatprep.mubr.f32.mxu0 0.0
        %2101 = vmatmul.mubr.f32.gmra.mrb[0].mxu0 %v2032
        %v2102 = vpop.f32.mrb[0].mxu0
        %v2103 = vadd.f32 0.0, %v2102
        %v2104 = vpop.f32.mrb[0].mxu0
        %2105 = vdwg.mxu0
        %v2106 = vsel %vm399, %v2103, -inf
        %2107 = vmax.xlane.f32.xlu0 %v2106
        %v2108 = vpop.xlane.xlu0 %2107
        %v2109 = vsub.f32 %v2103, %v2108
        %v2110 = vmul.f32 %v2109, 1.442695
        %v2111 = vpow.pop %v2110
        %v2112 = vsel %vm399, %v2111, 0.0
        %2113 = vadd.xlane.f32.xlu0 %v2112
        %v2114 = vpop.xlane.xlu0 %2113
        %v2115 = vrcp.pop %v2114
        %v2116 = vmul.f32 %v2111, %v2115
        %2117 = vrot.lane.b32.xlu0 %v318, 36
        %v2118 = vpop.permute.xlu0 %2117
        %v2121 = vsel %vm399, %v2116, 0
        %2123 = vmatprep.subr.mxu0 0.0
        %2124 = vmatpush1.msra.mxu0 %v2118
        %2125 = vmatprep.subr.mxu0 0.0
        %2126 = vmatpush1.msra.mxu0 0.0
        %2127 = vmatprep.subr.mxu0 0.0
        %2128 = vmatpush1.msra.mxu0 0.0
        %2129 = vmatprep.subr.mxu0 0.0
        %2130 = vmatpush1.msra.mxu0 0.0
        %2131 = vmatprep.subr.mxu0 0.0
        %2132 = vmatpush1.msra.mxu0 0.0
        %2133 = vmatprep.subr.mxu0 0.0
        %2134 = vmatpush1.msra.mxu0 0.0
        %2135 = vmatprep.subr.mxu0 0.0
        %2136 = vmatpush1.msra.mxu0 0.0
        %2137 = vmatprep.subr.mxu0 0.0
        %2138 = vmatpush1.msra.mxu0 0.0
        %2139 = vmatprep.subr.mxu0 0.0
        %2140 = vmatpush1.msra.mxu0 0.0
        %2141 = vmatprep.subr.mxu0 0.0
        %2142 = vmatpush1.msra.mxu0 0.0
        %2143 = vmatprep.subr.mxu0 0.0
        %2144 = vmatpush1.msra.mxu0 0.0
        %2145 = vmatprep.subr.mxu0 0.0
        %2146 = vmatpush1.msra.mxu0 0.0
        %2147 = vmatprep.subr.mxu0 0.0
        %2148 = vmatpush1.msra.mxu0 0.0
        %2149 = vmatprep.subr.mxu0 0.0
        %2150 = vmatpush1.msra.mxu0 0.0
        %2151 = vmatprep.subr.mxu0 0.0
        %2152 = vmatpush1.msra.mxu0 0.0
        %2153 = vmatprep.subr.mxu0 0.0
        %2154 = vmatpush1.msra.mxu0 0.0
        %2155 = vmatprep.subr.mxu0 0.0
        %2156 = vmatpush1.msra.mxu0 0.0
        %2157 = vmatprep.subr.mxu0 0.0
        %2158 = vmatpush1.msra.mxu0 0.0
        %2159 = vmatprep.subr.mxu0 0.0
        %2160 = vmatpush1.msra.mxu0 0.0
        %2161 = vmatprep.subr.mxu0 0.0
        %2162 = vmatpush1.msra.mxu0 0.0
        %2163 = vmatprep.subr.mxu0 0.0
        %2164 = vmatpush1.msra.mxu0 0.0
        %2165 = vmatprep.subr.mxu0 0.0
        %2166 = vmatpush1.msra.mxu0 0.0
        %2167 = vmatprep.subr.mxu0 0.0
        %2168 = vmatpush1.msra.mxu0 0.0
        %2169 = vmatprep.subr.mxu0 0.0
        %2170 = vmatpush1.msra.mxu0 0.0
        %2171 = vmatprep.subr.mxu0 0.0
        %2172 = vmatpush1.msra.mxu0 0.0
        %2173 = vmatprep.subr.mxu0 0.0
        %2174 = vmatpush1.msra.mxu0 0.0
        %2175 = vmatprep.subr.mxu0 0.0
        %2176 = vmatpush1.msra.mxu0 0.0
        %2177 = vmatprep.subr.mxu0 0.0
        %2178 = vmatpush1.msra.mxu0 0.0
        %2179 = vmatprep.subr.mxu0 0.0
        %2180 = vmatpush1.msra.mxu0 0.0
        %2181 = vmatprep.subr.mxu0 0.0
        %2182 = vmatpush1.msra.mxu0 0.0
        %2183 = vmatprep.subr.mxu0 0.0
        %2184 = vmatpush1.msra.mxu0 0.0
        %2185 = vmatprep.subr.mxu0 0.0
        %2186 = vmatpush1.msra.mxu0 0.0
        %2187 = vmatprep.mubr.f32.mxu0 0.0
        %2188 = vmatmul.mubr.f32.gmra.mrb[0].mxu0 %v2121
        %v2189 = vpop.f32.mrb[0].mxu0
        %v2190 = vadd.f32 0.0, %v2189
        %v2191 = vpop.f32.mrb[0].mxu0
        %2192 = vdwg.mxu0
        %s2193 = scalar_lea.vmem [#allocation7], 28
        %v2194 = vld [vmem:[%s2193] sm:$0xf]
        %v2196 = vsel %vm324, %v2190, 0
        %v2199 = vsel %vm658, %v2194, 0
        %2201 = vmatprep.subr.mxu0 0.0
        %2202 = vmatpush1.msra.mxu0 %v2199
        %2203 = vmatprep.subr.mxu0 0.0
        %2204 = vmatpush1.msra.mxu0 0.0
        %2205 = vmatprep.subr.mxu0 0.0
        %2206 = vmatpush1.msra.mxu0 0.0
        %2207 = vmatprep.subr.mxu0 0.0
        %2208 = vmatpush1.msra.mxu0 0.0
        %2209 = vmatprep.subr.mxu0 0.0
        %2210 = vmatpush1.msra.mxu0 0.0
        %2211 = vmatprep.subr.mxu0 0.0
        %2212 = vmatpush1.msra.mxu0 0.0
        %2213 = vmatprep.subr.mxu0 0.0
        %2214 = vmatpush1.msra.mxu0 0.0
        %2215 = vmatprep.subr.mxu0 0.0
        %2216 = vmatpush1.msra.mxu0 0.0
        %2217 = vmatprep.subr.mxu0 0.0
        %2218 = vmatpush1.msra.mxu0 0.0
        %2219 = vmatprep.subr.mxu0 0.0
        %2220 = vmatpush1.msra.mxu0 0.0
        %2221 = vmatprep.subr.mxu0 0.0
        %2222 = vmatpush1.msra.mxu0 0.0
        %2223 = vmatprep.subr.mxu0 0.0
        %2224 = vmatpush1.msra.mxu0 0.0
        %2225 = vmatprep.subr.mxu0 0.0
        %2226 = vmatpush1.msra.mxu0 0.0
        %2227 = vmatprep.subr.mxu0 0.0
        %2228 = vmatpush1.msra.mxu0 0.0
        %2229 = vmatprep.subr.mxu0 0.0
        %2230 = vmatpush1.msra.mxu0 0.0
        %2231 = vmatprep.subr.mxu0 0.0
        %2232 = vmatpush1.msra.mxu0 0.0
        %2233 = vmatprep.subr.mxu0 0.0
        %2234 = vmatpush1.msra.mxu0 0.0
        %2235 = vmatprep.subr.mxu0 0.0
        %2236 = vmatpush1.msra.mxu0 0.0
        %2237 = vmatprep.subr.mxu0 0.0
        %2238 = vmatpush1.msra.mxu0 0.0
        %2239 = vmatprep.subr.mxu0 0.0
        %2240 = vmatpush1.msra.mxu0 0.0
        %2241 = vmatprep.subr.mxu0 0.0
        %2242 = vmatpush1.msra.mxu0 0.0
        %2243 = vmatprep.subr.mxu0 0.0
        %2244 = vmatpush1.msra.mxu0 0.0
        %2245 = vmatprep.subr.mxu0 0.0
        %2246 = vmatpush1.msra.mxu0 0.0
        %2247 = vmatprep.subr.mxu0 0.0
        %2248 = vmatpush1.msra.mxu0 0.0
        %2249 = vmatprep.subr.mxu0 0.0
        %2250 = vmatpush1.msra.mxu0 0.0
        %2251 = vmatprep.subr.mxu0 0.0
        %2252 = vmatpush1.msra.mxu0 0.0
        %2253 = vmatprep.subr.mxu0 0.0
        %2254 = vmatpush1.msra.mxu0 0.0
        %2255 = vmatprep.subr.mxu0 0.0
        %2256 = vmatpush1.msra.mxu0 0.0
        %2257 = vmatprep.subr.mxu0 0.0
        %2258 = vmatpush1.msra.mxu0 0.0
        %2259 = vmatprep.subr.mxu0 0.0
        %2260 = vmatpush1.msra.mxu0 0.0
        %2261 = vmatprep.subr.mxu0 0.0
        %2262 = vmatpush1.msra.mxu0 0.0
        %2263 = vmatprep.subr.mxu0 0.0
        %2264 = vmatpush1.msra.mxu0 0.0
        %2265 = vmatprep.mubr.f32.mxu0 0.0
        %2266 = vmatmul.mubr.f32.gmra.mrb[0].mxu0 %v2196
        %v2267 = vpop.f32.mrb[0].mxu0
        %v2268 = vadd.f32 0.0, %v2267
        %v2269 = vpop.f32.mrb[0].mxu0
        %2270 = vdwg.mxu0
        %v2271 = vadd.f32 %v2027, %v2268
        %v2272 = vld [vmem:[%s3] sm:$0x1]
        %v2274 = vlaneseq
        %v2275 = vshrl.u32 %v2274, 7
        %v2276 = vsub.s32 0, %v2275
        %v2277 = vrot.slane %v2272, %v2276
        %v2279 = vadd.f32 %v2271, %v2277
        %2280 = vst.msk [vmem:[%s241] sm:$0xff] %vm247, %v2279
        %s2281 = sand.u32 %s119, 1
        %s2282 = scalar_lea.sflag [#allocation4], %s2281
        %s2283 = sand.u32 %s119, 1
        %s2284 = smul.addr %s2283, 8
        %s2285 = scalar_lea.vmem [#allocation8], %s2284
        // Predicated region
        $region49: #{tpu_custom_call.1} parent=35 // pred_check
          %p2286 = pneg %p129
        $region50: #{tpu_custom_call.1} parent=35 // pred_check_branch
          %2288 = sbr.rel (%p2286) target = $region52
        $region51: #{tpu_custom_call.1} parent=35 // pred_region
          %s2290 = ssub.s32 128, 128
          %2291 = vsyncadd %s2282, %s2290
          %s2292 = smul.addr %s22, 128
          %s2293 = scalar_lea.hbm %s4, %s2292
          %s2295 = sshll.u32 %s2285, 4
          %s2296 = int_to_ptr.vmem [resolvable:$true] %s2295
          %2298 = dma.vmem_to_hbm [thread:$0]  %s2296, 128, %s2293, %s2282
        $region52: #{tpu_custom_call.1} parent=35 // pred_fallthru
          _
      $region36: #{tpu_custom_call.1} parent=5 // pred_fallthru
        _
      %p2299 = scmp.le.s32.totalorder 2, %s17
      // Predicated region
      $region53: #{tpu_custom_call.1} parent=5 // pred_check
        %p2300 = pneg %p2299
      $region54: #{tpu_custom_call.1} parent=5 // pred_check_branch
        %2302 = sbr.rel (%p2300) target = $region56
      $region55: #{tpu_custom_call.1} parent=5 // pred_region
        %s2303 = ssub.s32 %s17, 2
        // Predicated region
        $region57: #{tpu_custom_call.1} parent=55 // pred_check
          %p2304 = pneg %p135
        $region58: #{tpu_custom_call.1} parent=55 // pred_check_branch
          %2306 = sbr.rel (%p2304) target = $region60
        $region59: #{tpu_custom_call.1} parent=55 // pred_region
          %s2307 = sand.u32 %s120, 1
          %s2308 = scalar_lea.sflag [#allocation4], %s2307
          %s2309 = sand.u32 %s120, 1
          %s2310 = smul.addr %s2309, 8
          %s2311 = scalar_lea.vmem [#allocation8], %s2310
          %2312 = dma.done %s2308, 128
        $region60: #{tpu_custom_call.1} parent=55 // pred_fallthru
          _
      $region56: #{tpu_custom_call.1} parent=5 // pred_fallthru
        _
    $region6: #{tpu_custom_call.1} parent=1 // loop_footer
      %s21 = sadd.s32 1, %s17
    $region7: #{tpu_custom_call.1} parent=1 // loop_footer_branch
      %16 = sbr.rel target = $region3
    $region8: #{tpu_custom_call.1} parent=1 // loop_exit
      _
    %2313 = vsyncpa [#allocation3], 1
    %s2314 = scalar_lea.sflag [#allocation3], 1
    %2315 = vsyncpa %s2314, 1
    %2316 = vsyncpa [#allocation6], 1
    %2317 = vsyncpa [#allocation4], 1
    %s2318 = scalar_lea.sflag [#allocation4], 1
    %2319 = vsyncpa %s2318, 1

</llo_original>
